<compile_context>
chip_gen: v7x
topology: tpu7x:2x2x1
jax: 0.10.0
libtpu: 0.0.40
codegen_flags: <defaults>
</compile_context>

<pallas_src>
import functools

import jax
import jax.numpy as jnp
from jax import lax
from jax.experimental import pallas as pl
from jax.experimental.pallas import tpu as pltpu


# ---------------------------------------------------------------------------
# helpers
# ---------------------------------------------------------------------------
def _round_up(x, m):
    return ((x + m - 1) // m) * m


def _vmem_capacity_bytes():
    """Physical VMEM of the current chip; conservative fallback (v7x = 64 MiB)."""
    try:
        return int(pltpu.get_tpu_info().vmem_capacity_bytes)
    except Exception:
        return 64 * 1024 * 1024


def _choose_tile(R, k_pad, c0_pad, couts_pad):
    """VMEM-budgeted query-row tile TM and the vmem_limit_bytes to request."""
    cap = _vmem_capacity_bytes()
    lane = 128
    c_max = max(couts_pad)
    c_last = couts_pad[-1]
    cins = [c0_pad] + list(couts_pad[:-1])
    # parameters: bf16 weights + f32 shifts; assume the pipeline double-buffers
    w_bytes = 2 * sum(ci * co * 2 + co * 4 for ci, co in zip(cins, couts_pad))
    # Per-query-point VMEM bytes.  The minor dim of every VMEM buffer is stored
    # lane-padded to 128, so the narrow (tm*K, C0_pad~8) x tile really costs
    # k_pad*128*2 bytes per query row — NOT k_pad*c0_pad*2 (review fix).
    per_q = (2 * k_pad * lane * 2        # x tile: bf16, lane-padded, double-buffered
             + k_pad * c_max * 4         # live f32 layer accumulator
             + 2 * k_pad * c_max * 2     # bf16 activations feeding / leaving a layer
             + 2 * c_last * 4)           # output tile: f32, double-buffered
    budget = int(cap * 0.7) - w_bytes - (4 << 20)   # margin: internal scratch etc.
    tm = budget // per_q if per_q > 0 else 8
    # 256-row cap also keeps per-layer f32->bf16 intermediate store traffic
    # modest (v5e has a single vst slot).
    tm = max(8, min(256, (tm // 8) * 8))
    # keep >= ~8 grid steps so ("parallel",) load-balances v7x's 2 TensorCores
    tm = min(tm, max(8, _round_up((R + 7) // 8, 8)))
    tm = min(tm, _round_up(R, 8))
    # request only what is actually needed (+50% margin), not 0.8*capacity
    est = tm * per_q + w_bytes + (4 << 20)
    vmem_limit = int(min(cap * 0.9, max(est * 3 // 2, 32 << 20)))
    return tm, vmem_limit


# ---------------------------------------------------------------------------
# Pallas kernel: shared MLP (folded 1x1 conv + BN) + ReLU + max over K
# ---------------------------------------------------------------------------
def _make_mlp_max_kernel(num_layers, tm, k):
    """x tile (TM*K, C0_pad) bf16  ->  out tile (TM, C_last_pad) f32."""
    def kernel(x_ref, *refs):
        out_ref = refs[-1]
        params = refs[:-1]                       # (W_folded, shift_folded) per layer
        h = x_ref[...]                           # bf16 rows, already flattened
        for j in range(num_layers):
            w = params[2 * j][...]               # (Cin_pad, Cout_pad) bf16
            sh = params[2 * j + 1][...]          # (1, Cout_pad)       f32
            acc = jnp.dot(h, w, preferred_element_type=jnp.float32)   # MXU
            acc = jnp.maximum(acc + sh, 0.0)     # folded conv-bias+BN, then ReLU
            h = acc.astype(jnp.bfloat16) if j + 1 < num_layers else acc
        c = h.shape[-1]
        # max over the K (neighbourhood) axis == torch.max(grouped, 2)[0]
        # (K is a multiple of 8, so this reshape stays sublane-aligned)
        out_ref[...] = jnp.max(h.reshape(tm, k, c), axis=1)
    return kernel


def _fold_and_pad_params(layer_params, c0_pad):
    """Fold conv bias + BN affine into (W', shift') and pad for the TPU.

    relu((h @ W + b) * scale + shift) == relu(h @ (W*scale) + (b*scale + shift))
    Cout is zero-padded to a multiple of 128 (lane-dense matmuls and stores);
    padded channels stay exactly 0 through ReLU / K-max and are sliced off.
    """
    folded = []
    cin_pad = c0_pad
    for (w, b, sc, sh) in layer_params:
        cin, cout = w.shape
        cout_pad = _round_up(cout, 128)
        w_f = w * sc                              # (cin, cout)
        sh_f = b * sc + sh                        # (1, cout)
        w_p = jnp.zeros((cin_pad, cout_pad), jnp.float32).at[:cin, :cout].set(w_f)
        sh_p = jnp.zeros((1, cout_pad), jnp.float32).at[:, :cout].set(sh_f)
        folded.append((w_p.astype(jnp.bfloat16), sh_p))
        cin_pad = cout_pad
    return folded


def _grouped_mlp_max_pallas(src_flat, group_idx, centers, n_points,
                            layer_params, c0_pad):
    """Fused grouping + shared-MLP + K-max for one MSG scale.

    src_flat : (B*N, C0_pad) bf16  pre-concatenated [features | xyz] rows
    group_idx: (B, S, K)      int32 per-batch neighbour indices
    centers  : (R, C0_pad)    f32   query centres placed in the xyz channels
    Returns (R, C_last) float32.
    """
    B, S, K = group_idx.shape
    R = B * S
    c_last = layer_params[-1][0].shape[1]

    folded = _fold_and_pad_params(layer_params, c0_pad)
    couts_pad = [w.shape[1] for (w, _) in folded]
    c_last_pad = couts_pad[-1]

    K_pad = _round_up(max(K, 8), 8)
    tm, vmem_limit = _choose_tile(R, K_pad, c0_pad, couts_pad)
    R_pad = _round_up(R, tm)

    # ---- all padding is applied to SMALL arrays (indices / centres) ----------
    idx = group_idx + (jnp.arange(B, dtype=group_idx.dtype) * n_points)[:, None, None]
    if K_pad != K:
        # replicate the first (always in-radius) neighbour; the K-max is unchanged
        idx = jnp.concatenate(
            [idx, jnp.broadcast_to(idx[:, :, :1], (B, S, K_pad - K))], axis=-1)
    idx = idx.reshape(R, K_pad)
    if R_pad != R:
        idx = jnp.pad(idx, ((0, R_pad - R), (0, 0)))         # row 0 is a valid index
        centers = jnp.pad(centers, ((0, R_pad - R), (0, 0)))

    # ---- one fused pass over the big tensor: gather -> subtract centre -> bf16
    # (the subtraction / cast are elementwise consumers of the gather, so XLA
    # fuses them; the write is already in the kernel's flattened layout)
    grouped = jnp.take(src_flat, idx.reshape(-1), axis=0, mode="clip")
    grouped = grouped.reshape(R_pad, K_pad, c0_pad).astype(jnp.float32)
    x_flat = ((grouped - centers[:, None, :])
              .astype(jnp.bfloat16)
              .reshape(R_pad * K_pad, c0_pad))

    in_specs = [pl.BlockSpec((tm * K_pad, c0_pad), lambda i: (i, 0))]
    flat_params = []
    for (w, sh) in folded:
        in_specs.append(pl.BlockSpec(w.shape, lambda i: (0, 0)))
        in_specs.append(pl.BlockSpec(sh.shape, lambda i: (0, 0)))
        flat_params.extend((w, sh))

    kernel = _make_mlp_max_kernel(len(folded), tm, K_pad)
    out = pl.pallas_call(
        kernel,
        out_shape=jax.ShapeDtypeStruct((R_pad, c_last_pad), jnp.float32),
        grid=(R_pad // tm,),
        in_specs=in_specs,
        out_specs=pl.BlockSpec((tm, c_last_pad), lambda i: (i, 0)),
        compiler_params=pltpu.CompilerParams(
            dimension_semantics=("parallel",),
            vmem_limit_bytes=vmem_limit),
    )(x_flat, *flat_params)
    return out[:R, :c_last]


def mlp_max_ref(x, layer_params):
    """Pure-JAX f32 reference for the same hot path (unfolded params)."""
    R, K, C0 = x.shape
    h = x.reshape(R * K, C0)
    for (w, b, sc, sh) in layer_params:
        h = jnp.maximum((jnp.dot(h, w) + b) * sc + sh, 0.0)
    return jnp.max(h.reshape(R, K, -1), axis=1)


# ---------------------------------------------------------------------------
# Plain-JAX glue (gathers / top-k / sequential FPS)
# ---------------------------------------------------------------------------
def square_distance(src, dst):
    # src [B,N,C], dst [B,M,C] -> [B,N,M]
    dist = -2.0 * jnp.einsum("bnc,bmc->bnm", src, dst)
    dist = dist + jnp.sum(src ** 2, -1)[:, :, None]
    dist = dist + jnp.sum(dst ** 2, -1)[:, None, :]
    return dist


def index_points(points, idx):
    # points [B,N,C], idx [B,...] -> [B,...,C]
    B = points.shape[0]
    idx_flat = idx.reshape(B, -1)
    gathered = jnp.take_along_axis(points, idx_flat[..., None], axis=1)
    return gathered.reshape(*idx.shape, points.shape[-1])


def farthest_point_sample(xyz, npoint, key):
    # TODO(synk): Pallas FPS with the (B,N) distance array resident in VMEM if
    # the sequential loop dominates wall time at production npoint.
    B, N, _ = xyz.shape
    batch_idx = jnp.arange(B)
    farthest0 = jax.random.randint(key, (B,), 0, N, dtype=jnp.int32)
    centroids0 = jnp.zeros((B, npoint), dtype=jnp.int32)
    distance0 = jnp.full((B, N), 1e10, dtype=jnp.float32)

    def body(i, carry):
        centroids, distance, farthest = carry
        centroids = lax.dynamic_update_slice(centroids, farthest[:, None], (0, i))
        centroid = xyz[batch_idx, farthest, :][:, None, :]       # (B,1,3)
        dist = jnp.sum((xyz - centroid) ** 2, -1)
        distance = jnp.where(dist < distance, dist, distance)
        farthest = jnp.argmax(distance, axis=-1).astype(jnp.int32)
        return centroids, distance, farthest

    centroids, _, _ = lax.fori_loop(0, npoint, body,
                                    (centroids0, distance0, farthest0))
    return centroids


def query_ball_point(radius, nsample, xyz, new_xyz):
    # top-k selection of the nsample smallest masked indices instead of a full
    # O(N log N) sort over N — equivalent to sort(...)[:, :, :nsample].
    B, N, _ = xyz.shape
    S = new_xyz.shape[1]
    sqrdists = square_distance(new_xyz, xyz)                     # (B,S,N)
    idx = jnp.broadcast_to(jnp.arange(N, dtype=jnp.int32), (B, S, N))
    masked = jnp.where(sqrdists > radius ** 2, N, idx)
    neg_vals, _ = lax.top_k(-masked, nsample)
    group_idx = -neg_vals                                        # ascending order
    group_first = group_idx[:, :, 0:1]
    # NOTE: if a query had no in-radius neighbour the sentinel N would survive
    # in group_first (same edge case as the PyTorch module); the query point is
    # always within its own radius so this cannot happen in practice.
    group_idx = jnp.where(group_idx == N, group_first, group_idx)
    return group_idx


# ---------------------------------------------------------------------------
# PointNetSetAbstractionMsg (forward)
# ---------------------------------------------------------------------------
def init_params(key, in_channel, mlp_list):
    """Deterministic parameter init.  Per layer: (W[Cin,Cout], bias[1,Cout],
    bn_scale[1,Cout], bn_shift[1,Cout]) with BN in folded inference form."""
    eps = 1e-5
    params = []
    for mlp in mlp_list:
        layers = []
        last = in_channel + 3
        for out_c in mlp:
            key, k1, k2 = jax.random.split(key, 3)
            w = (jax.random.normal(k1, (last, out_c), jnp.float32)
                 * (1.0 / jnp.sqrt(last)))
            b = jax.random.normal(k2, (1, out_c), jnp.float32) * 0.01
            gamma = 1.0 + 0.1 * jnp.arange(out_c, dtype=jnp.float32)[None, :]
            beta = 0.01 * jnp.arange(out_c, dtype=jnp.float32)[None, :]
            r_mean = 0.05 * jnp.arange(out_c, dtype=jnp.float32)[None, :]
            r_var = 1.0 + 0.02 * jnp.arange(out_c, dtype=jnp.float32)[None, :]
            scale = gamma / jnp.sqrt(r_var + eps)
            shift = beta - r_mean * scale
            layers.append((w, b, scale, shift))
            last = out_c
        params.append(layers)
    return params


def pointnet_sa_msg_forward(xyz, points, params, npoint,
                            radius_list, nsample_list, fps_key,
                            use_pallas=True):
    """
    xyz:    [B, 3, N]  (channels-first, like PyTorch)
    points: [B, D, N] or None
    returns new_xyz [B, 3, S], new_points_concat [B, D', S]
    """
    xyz_t = jnp.transpose(xyz, (0, 2, 1))                        # (B,N,3)
    points_t = (jnp.transpose(points, (0, 2, 1))
                if points is not None else None)                 # (B,N,D)
    B, N, _ = xyz_t.shape
    S = npoint
    D = points_t.shape[-1] if points_t is not None else 0
    C0 = D + 3
    R = B * S

    fps_idx = farthest_point_sample(xyz_t, S, fps_key)
    new_xyz = index_points(xyz_t, fps_idx)                       # (B,S,3)

    if use_pallas:
        c0_pad = _round_up(max(C0, 8), 8)
        # channels-last source rows [features | xyz] (matches torch.cat order),
        # padded + cast ONCE on the small (B,N,C0) tensor
        src = (jnp.concatenate([points_t, xyz_t], axis=-1)
               if points_t is not None else xyz_t)
        src_flat = jnp.pad(src, ((0, 0), (0, 0), (0, c0_pad - C0)))
        src_flat = src_flat.reshape(B * N, c0_pad).astype(jnp.bfloat16)
        # query centres land in the xyz channels; feature channels stay 0 so the
        # fused subtraction only affects xyz (== `grouped_xyz -= new_xyz`)
        centers = jnp.zeros((R, c0_pad), jnp.float32)
        centers = centers.at[:, D:D + 3].set(new_xyz.reshape(R, 3))

    new_points_list = []
    for i, radius in enumerate(radius_list):
        K = nsample_list[i]
        group_idx = query_ball_point(radius, K, xyz_t, new_xyz)  # (B,S,K)
        if use_pallas:
            feat = _grouped_mlp_max_pallas(src_flat, group_idx, centers, N,
                                           params[i], c0_pad)    # (R, Clast)
        else:
            grouped_xyz = index_points(xyz_t, group_idx) - new_xyz[:, :, None, :]
            if points_t is not None:
                grouped = jnp.concatenate(
                    [index_points(points_t, group_idx), grouped_xyz], axis=-1)
            else:
                grouped = grouped_xyz
            feat = mlp_max_ref(
                grouped.reshape(R, K, C0).astype(jnp.float32), params[i])
        new_points_list.append(
            jnp.transpose(feat.reshape(B, S, -1), (0, 2, 1)))    # (B,Clast,S)

    new_xyz_out = jnp.transpose(new_xyz, (0, 2, 1))              # (B,3,S)
    new_points_concat = jnp.concatenate(new_points_list, axis=1)
    return new_xyz_out, new_points_concat


# ---------------------------------------------------------------------------
if __name__ == "__main__":
    # module config (small)
    B, N, D = 2, 32, 4
    npoint = 8
    radius_list = [0.2, 0.4]
    nsample_list = [8, 16]
    in_channel = D
    mlp_list = [[16, 32], [16, 32]]

    key = jax.random.PRNGKey(0)
    k_xyz, k_pts, k_par, k_fps = jax.random.split(key, 4)

    xyz = jax.random.uniform(k_xyz, (B, 3, N), jnp.float32)      # [B,3,N]
    points = jax.random.normal(k_pts, (B, D, N), jnp.float32)    # [B,D,N]
    params = init_params(k_par, in_channel, mlp_list)

    fwd = functools.partial(
        pointnet_sa_msg_forward,
        npoint=npoint, radius_list=radius_list,
        nsample_list=nsample_list, fps_key=k_fps)

    new_xyz, new_points = jax.jit(
        lambda a, b: fwd(a, b, params, use_pallas=True))(xyz, points)
    jax.block_until_ready((new_xyz, new_points))

    # pure-JAX f32 reference (same FPS / grouping path, unfolded MLP)
    ref_xyz, ref_points = jax.jit(
        lambda a, b: fwd(a, b, params, use_pallas=False))(xyz, points)
    jax.block_until_ready((ref_xyz, ref_points))

    assert new_xyz.shape == (B, 3, npoint)
    assert new_points.shape == (B, sum(m[-1] for m in mlp_list), npoint)
    assert bool(jnp.allclose(new_xyz, ref_xyz))
    # tolerance covers bf16 weights/activations (MXU) vs the pure-f32 reference
    assert bool(jnp.allclose(new_points, ref_points, rtol=5e-2, atol=1.5e-1)), (
        float(jnp.max(jnp.abs(new_points - ref_points))))
    print("KERNEL_OK")
</pallas_src>

<mosaic_0001>
module attributes {stable_mosaic.version = 11 : i64} {
  func.func @kernel(%arg0: i32, %arg1: memref<64x8xbf16, #tpu.memory_space<vmem>>, %arg2: memref<8x128xbf16, #tpu.memory_space<vmem>>, %arg3: memref<1x128xf32, #tpu.memory_space<vmem>>, %arg4: memref<128x128xbf16, #tpu.memory_space<vmem>>, %arg5: memref<1x128xf32, #tpu.memory_space<vmem>>, %arg6: memref<8x128xf32, #tpu.memory_space<vmem>>) attributes {dimension_semantics = [#tpu.dimension_semantics<parallel>], iteration_bounds = array<i64: 2>, scalar_prefetch = 0 : i64, scratch_operands = 0 : i64, tpu.core_type = #tpu.core_type<tc>, window_params = [{transform_indices = @transform_0, window_bounds = array<i64: 64, 8>}, {pipeline_mode = #tpu.pipeline_mode<synchronous>, transform_indices = @transform_1, window_bounds = array<i64: 8, 128>}, {pipeline_mode = #tpu.pipeline_mode<synchronous>, transform_indices = @transform_2, window_bounds = array<i64: 1, 128>}, {pipeline_mode = #tpu.pipeline_mode<synchronous>, transform_indices = @transform_3, window_bounds = array<i64: 128, 128>}, {pipeline_mode = #tpu.pipeline_mode<synchronous>, transform_indices = @transform_4, window_bounds = array<i64: 1, 128>}, {transform_indices = @transform_5, window_bounds = array<i64: 8, 128>}]} {
    %c0 = arith.constant 0 : index
    %c0_0 = arith.constant 0 : index
    %0 = vector.load %arg1[%c0, %c0_0] : memref<64x8xbf16, #tpu.memory_space<vmem>>, vector<64x8xbf16>
    %c0_1 = arith.constant 0 : index
    %c0_2 = arith.constant 0 : index
    %1 = vector.load %arg2[%c0_1, %c0_2] : memref<8x128xbf16, #tpu.memory_space<vmem>>, vector<8x128xbf16>
    %c0_3 = arith.constant 0 : index
    %c0_4 = arith.constant 0 : index
    %2 = vector.load %arg3[%c0_3, %c0_4] : memref<1x128xf32, #tpu.memory_space<vmem>>, vector<1x128xf32>
    %cst = arith.constant dense<0.000000e+00> : vector<64x128xf32>
    %3 = tpu.matmul %0, %1, %cst {dimension_numbers = #tpu.dot_dimension_numbers<[1], [0], [0], [1], [0, 0, 1, 1], [], []>} : vector<64x8xbf16>, vector<8x128xbf16>, vector<64x128xf32> -> vector<64x128xf32>
    %4 = vector.broadcast %2 : vector<1x128xf32> to vector<64x128xf32>
    %5 = arith.addf %3, %4 : vector<64x128xf32>
    %cst_5 = arith.constant 0.000000e+00 : f32
    %6 = vector.broadcast %cst_5 : f32 to vector<64x128xf32>
    %7 = arith.maximumf %5, %6 : vector<64x128xf32>
    %8 = arith.truncf %7 : vector<64x128xf32> to vector<64x128xbf16>
    %c0_6 = arith.constant 0 : index
    %c0_7 = arith.constant 0 : index
    %9 = vector.load %arg4[%c0_6, %c0_7] : memref<128x128xbf16, #tpu.memory_space<vmem>>, vector<128x128xbf16>
    %c0_8 = arith.constant 0 : index
    %c0_9 = arith.constant 0 : index
    %10 = vector.load %arg5[%c0_8, %c0_9] : memref<1x128xf32, #tpu.memory_space<vmem>>, vector<1x128xf32>
    %cst_10 = arith.constant dense<0.000000e+00> : vector<64x128xf32>
    %11 = tpu.matmul %8, %9, %cst_10 {dimension_numbers = #tpu.dot_dimension_numbers<[1], [0], [0], [1], [0, 0, 1, 1], [], []>} : vector<64x128xbf16>, vector<128x128xbf16>, vector<64x128xf32> -> vector<64x128xf32>
    %12 = vector.broadcast %10 : vector<1x128xf32> to vector<64x128xf32>
    %13 = arith.addf %11, %12 : vector<64x128xf32>
    %cst_11 = arith.constant 0.000000e+00 : f32
    %14 = vector.broadcast %cst_11 : f32 to vector<64x128xf32>
    %15 = arith.maximumf %13, %14 : vector<64x128xf32>
    %16 = vector.shape_cast %15 : vector<64x128xf32> to vector<8x8x128xf32>
    %cst_12 = arith.constant dense<0xFF800000> : vector<8x128xf32>
    %17 = vector.multi_reduction <maximumf>, %16, %cst_12 [1] : vector<8x8x128xf32> to vector<8x128xf32>
    %c0_13 = arith.constant 0 : index
    %c0_14 = arith.constant 0 : index
    %18 = vector.load %arg6[%c0_13, %c0_14] : memref<8x128xf32, #tpu.memory_space<vmem>>, vector<8x128xf32>
    tpu.vector_store %arg6[%c0_13, %c0_14], %17 {strides = array<i32>} : memref<8x128xf32, #tpu.memory_space<vmem>>, vector<8x128xf32>,
    return
  }
  func.func @transform_0(%arg0: i32) -> (i32, i32) {
    %c0_i32 = arith.constant 0 : i32
    %c0_i32_0 = arith.constant 0 : i32
    return %arg0, %c0_i32 : i32, i32
  }
  func.func @transform_1(%arg0: i32) -> (i32, i32) {
    %c0_i32 = arith.constant 0 : i32
    %c0_i32_0 = arith.constant 0 : i32
    %c0_i32_1 = arith.constant 0 : i32
    return %c0_i32, %c0_i32_0 : i32, i32
  }
  func.func @transform_2(%arg0: i32) -> (i32, i32) {
    %c0_i32 = arith.constant 0 : i32
    %c0_i32_0 = arith.constant 0 : i32
    %c0_i32_1 = arith.constant 0 : i32
    return %c0_i32, %c0_i32_0 : i32, i32
  }
  func.func @transform_3(%arg0: i32) -> (i32, i32) {
    %c0_i32 = arith.constant 0 : i32
    %c0_i32_0 = arith.constant 0 : i32
    %c0_i32_1 = arith.constant 0 : i32
    return %c0_i32, %c0_i32_0 : i32, i32
  }
  func.func @transform_4(%arg0: i32) -> (i32, i32) {
    %c0_i32 = arith.constant 0 : i32
    %c0_i32_0 = arith.constant 0 : i32
    %c0_i32_1 = arith.constant 0 : i32
    return %c0_i32, %c0_i32_0 : i32, i32
  }
  func.func @transform_5(%arg0: i32) -> (i32, i32) {
    %c0_i32 = arith.constant 0 : i32
    %c0_i32_0 = arith.constant 0 : i32
    return %arg0, %c0_i32 : i32, i32
  }
}

module attributes {stable_mosaic.version = 11 : i64} {
  func.func @kernel(%arg0: i32, %arg1: memref<128x8xbf16, #tpu.memory_space<vmem>>, %arg2: memref<8x128xbf16, #tpu.memory_space<vmem>>, %arg3: memref<1x128xf32, #tpu.memory_space<vmem>>, %arg4: memref<128x128xbf16, #tpu.memory_space<vmem>>, %arg5: memref<1x128xf32, #tpu.memory_space<vmem>>, %arg6: memref<8x128xf32, #tpu.memory_space<vmem>>) attributes {dimension_semantics = [#tpu.dimension_semantics<parallel>], iteration_bounds = array<i64: 2>, scalar_prefetch = 0 : i64, scratch_operands = 0 : i64, tpu.core_type = #tpu.core_type<tc>, window_params = [{transform_indices = @transform_0, window_bounds = array<i64: 128, 8>}, {pipeline_mode = #tpu.pipeline_mode<synchronous>, transform_indices = @transform_1, window_bounds = array<i64: 8, 128>}, {pipeline_mode = #tpu.pipeline_mode<synchronous>, transform_indices = @transform_2, window_bounds = array<i64: 1, 128>}, {pipeline_mode = #tpu.pipeline_mode<synchronous>, transform_indices = @transform_3, window_bounds = array<i64: 128, 128>}, {pipeline_mode = #tpu.pipeline_mode<synchronous>, transform_indices = @transform_4, window_bounds = array<i64: 1, 128>}, {transform_indices = @transform_5, window_bounds = array<i64: 8, 128>}]} {
    %c0 = arith.constant 0 : index
    %c0_0 = arith.constant 0 : index
    %0 = vector.load %arg1[%c0, %c0_0] : memref<128x8xbf16, #tpu.memory_space<vmem>>, vector<128x8xbf16>
    %c0_1 = arith.constant 0 : index
    %c0_2 = arith.constant 0 : index
    %1 = vector.load %arg2[%c0_1, %c0_2] : memref<8x128xbf16, #tpu.memory_space<vmem>>, vector<8x128xbf16>
    %c0_3 = arith.constant 0 : index
    %c0_4 = arith.constant 0 : index
    %2 = vector.load %arg3[%c0_3, %c0_4] : memref<1x128xf32, #tpu.memory_space<vmem>>, vector<1x128xf32>
    %cst = arith.constant dense<0.000000e+00> : vector<128x128xf32>
    %3 = tpu.matmul %0, %1, %cst {dimension_numbers = #tpu.dot_dimension_numbers<[1], [0], [0], [1], [0, 0, 1, 1], [], []>} : vector<128x8xbf16>, vector<8x128xbf16>, vector<128x128xf32> -> vector<128x128xf32>
    %4 = vector.broadcast %2 : vector<1x128xf32> to vector<128x128xf32>
    %5 = arith.addf %3, %4 : vector<128x128xf32>
    %cst_5 = arith.constant 0.000000e+00 : f32
    %6 = vector.broadcast %cst_5 : f32 to vector<128x128xf32>
    %7 = arith.maximumf %5, %6 : vector<128x128xf32>
    %8 = arith.truncf %7 : vector<128x128xf32> to vector<128x128xbf16>
    %c0_6 = arith.constant 0 : index
    %c0_7 = arith.constant 0 : index
    %9 = vector.load %arg4[%c0_6, %c0_7] : memref<128x128xbf16, #tpu.memory_space<vmem>>, vector<128x128xbf16>
    %c0_8 = arith.constant 0 : index
    %c0_9 = arith.constant 0 : index
    %10 = vector.load %arg5[%c0_8, %c0_9] : memref<1x128xf32, #tpu.memory_space<vmem>>, vector<1x128xf32>
    %cst_10 = arith.constant dense<0.000000e+00> : vector<128x128xf32>
    %11 = tpu.matmul %8, %9, %cst_10 {dimension_numbers = #tpu.dot_dimension_numbers<[1], [0], [0], [1], [0, 0, 1, 1], [], []>} : vector<128x128xbf16>, vector<128x128xbf16>, vector<128x128xf32> -> vector<128x128xf32>
    %12 = vector.broadcast %10 : vector<1x128xf32> to vector<128x128xf32>
    %13 = arith.addf %11, %12 : vector<128x128xf32>
    %cst_11 = arith.constant 0.000000e+00 : f32
    %14 = vector.broadcast %cst_11 : f32 to vector<128x128xf32>
    %15 = arith.maximumf %13, %14 : vector<128x128xf32>
    %16 = vector.shape_cast %15 : vector<128x128xf32> to vector<8x16x128xf32>
    %cst_12 = arith.constant dense<0xFF800000> : vector<8x128xf32>
    %17 = vector.multi_reduction <maximumf>, %16, %cst_12 [1] : vector<8x16x128xf32> to vector<8x128xf32>
    %c0_13 = arith.constant 0 : index
    %c0_14 = arith.constant 0 : index
    %18 = vector.load %arg6[%c0_13, %c0_14] : memref<8x128xf32, #tpu.memory_space<vmem>>, vector<8x128xf32>
    tpu.vector_store %arg6[%c0_13, %c0_14], %17 {strides = array<i32>} : memref<8x128xf32, #tpu.memory_space<vmem>>, vector<8x128xf32>,
    return
  }
  func.func @transform_0(%arg0: i32) -> (i32, i32) {
    %c0_i32 = arith.constant 0 : i32
    %c0_i32_0 = arith.constant 0 : i32
    return %arg0, %c0_i32 : i32, i32
  }
  func.func @transform_1(%arg0: i32) -> (i32, i32) {
    %c0_i32 = arith.constant 0 : i32
    %c0_i32_0 = arith.constant 0 : i32
    %c0_i32_1 = arith.constant 0 : i32
    return %c0_i32, %c0_i32_0 : i32, i32
  }
  func.func @transform_2(%arg0: i32) -> (i32, i32) {
    %c0_i32 = arith.constant 0 : i32
    %c0_i32_0 = arith.constant 0 : i32
    %c0_i32_1 = arith.constant 0 : i32
    return %c0_i32, %c0_i32_0 : i32, i32
  }
  func.func @transform_3(%arg0: i32) -> (i32, i32) {
    %c0_i32 = arith.constant 0 : i32
    %c0_i32_0 = arith.constant 0 : i32
    %c0_i32_1 = arith.constant 0 : i32
    return %c0_i32, %c0_i32_0 : i32, i32
  }
  func.func @transform_4(%arg0: i32) -> (i32, i32) {
    %c0_i32 = arith.constant 0 : i32
    %c0_i32_0 = arith.constant 0 : i32
    %c0_i32_1 = arith.constant 0 : i32
    return %c0_i32, %c0_i32_0 : i32, i32
  }
  func.func @transform_5(%arg0: i32) -> (i32, i32) {
    %c0_i32 = arith.constant 0 : i32
    %c0_i32_0 = arith.constant 0 : i32
    return %arg0, %c0_i32 : i32, i32
  }
}

</mosaic_0001>

<llo_original>
// kernel: custom-call.4
$region0: #{custom-call.4}
  %s0 = inlined_call_operand.vmem [shape: f32[2,32], index: 0, kind: output, shape index: {}]

// kernel: custom-call.12
$region0: #{custom-call.12}
  %s0 = inlined_call_operand.vmem [shape: s32[2,8], index: 0, kind: output, shape index: {}]

// kernel: _lambda_.2
$region0: #{_lambda_.2}
  #allocation0 [shape = 'u32[]', space=smem, size = 0x4, offset = 0x4, fixed_abs, tag = 'smem constant byte address 0x4 - core index']
  #allocation1 [shape = 'u32[144,128]{1,0:T(1,128)}', space=vmem, size = 0x12000, scoped, tag = 'internal scratch']
  %s0 = inlined_call_operand.vmem [shape: bf16[128,8], index: 0, kind: input, shape index: {}]
  %s1 = inlined_call_operand.vmem [shape: bf16[8,128], index: 1, kind: input, shape index: {}]
  %s2 = inlined_call_operand.vmem [shape: f32[1,128], index: 2, kind: input, shape index: {}]
  %s3 = inlined_call_operand.vmem [shape: bf16[128,128], index: 3, kind: input, shape index: {}]
  %s4 = inlined_call_operand.vmem [shape: f32[1,128], index: 4, kind: input, shape index: {}]
  %s5 = inlined_call_operand.vmem [shape: f32[16,128], index: 5, kind: output, shape index: {}]
  %s6 = sld [smem:[#allocation0]]
  $region53: #{_lambda_.2} parent=0
    _
  %s8 = ssub.s32 1, %s6
  %s9 = scalar_select 0, %s8, %s6
  loop: start=0, step=1, limit=4
  $region2: #{_lambda_.2} parent=0 // loop_pre_header
    _
  $region3: #{_lambda_.2} parent=0 // loop_header
    %s11 = sphi 0, %s15
    %p12 = scmp.ge.s32.totalorder %s11, 4
    %s21 = sphi 0, %s23
    %s24 = sphi 0, %s21
    %s25 = sphi 0, %s24
    %s41 = sphi 0, %s25
    %s45 = sphi 0, %s45
    %s47 = sphi 0, %s45
    %s48 = sphi 0, %s47
    %s62 = sphi 0, %s48
    %s66 = sphi 0, %s66
    %s68 = sphi 0, %s66
    %s69 = sphi 0, %s68
    %s83 = sphi 0, %s69
    %s87 = sphi 0, %s87
    %s89 = sphi 0, %s87
    %s90 = sphi 0, %s89
    %s104 = sphi 0, %s90
    %s108 = sphi 0, %s108
    %s110 = sphi 0, %s108
    %s111 = sphi 0, %s110
    %s125 = sphi 0, %s111
    %s131 = sphi 0, %s133
    %s134 = sphi 0, %s131
    %s135 = sphi 0, %s134
    %s151 = sphi 0, %s135
  $region4: #{_lambda_.2} parent=0 // loop_header_branch
    %14 = sbr.rel (%p12) target = $region8
  $region5: #{_lambda_.2} parent=0 // loop_body
    %s16 = ssub.s32 %s11, 1
    %s17 = ssub.s32 %s11, 2
    %s18 = sadd.s32 %s11, 1
    %s19 = ssub.s32 %s11, %s18
    %p20 = scmp.eq.s32.totalorder %s19, 0
    %s22 = sadd.s32 %s21, 1
    %s23 = scalar_select %p20, %s21, %s22
    %p26 = pneg %p20
    %p27 = scmp.eq.s32.totalorder %s11, 1
    %p28 = por %p26, %p27
    %p29 = scmp.ne.s32.totalorder %s21, %s24
    %p30 = scmp.eq.s32.totalorder %s11, 0
    %p31 = por %p29, %p30
    %p32 = scmp.ne.s32.totalorder %s21, %s24
    %p33 = scmp.eq.s32.totalorder %s16, 1
    %p34 = por %p32, %p33
    %p35 = scmp.ne.s32.totalorder %s24, %s25
    %p36 = scmp.eq.s32.totalorder %s16, 0
    %p37 = por %p35, %p36
    %p38 = scmp.ne.s32.totalorder %s24, %s25
    %p39 = scmp.eq.s32.totalorder %s17, 1
    %p40 = por %p38, %p39
    %p42 = scmp.ne.s32.totalorder %s25, %s41
    %p43 = scmp.eq.s32.totalorder %s17, 0
    %p44 = por %p42, %p43
    %s46 = sadd.s32 %s45, 1
    %p49 = scmp.eq.s32.totalorder %s11, 1
    %p50 = scmp.ne.s32.totalorder %s45, %s47
    %p51 = scmp.eq.s32.totalorder %s11, 0
    %p52 = por %p50, %p51
    %p53 = scmp.ne.s32.totalorder %s45, %s47
    %p54 = scmp.eq.s32.totalorder %s16, 1
    %p55 = por %p53, %p54
    %p56 = scmp.ne.s32.totalorder %s47, %s48
    %p57 = scmp.eq.s32.totalorder %s16, 0
    %p58 = por %p56, %p57
    %p59 = scmp.ne.s32.totalorder %s47, %s48
    %p60 = scmp.eq.s32.totalorder %s17, 1
    %p61 = por %p59, %p60
    %p63 = scmp.ne.s32.totalorder %s48, %s62
    %p64 = scmp.eq.s32.totalorder %s17, 0
    %p65 = por %p63, %p64
    %s67 = sadd.s32 %s66, 1
    %p70 = scmp.eq.s32.totalorder %s11, 1
    %p71 = scmp.ne.s32.totalorder %s66, %s68
    %p72 = scmp.eq.s32.totalorder %s11, 0
    %p73 = por %p71, %p72
    %p74 = scmp.ne.s32.totalorder %s66, %s68
    %p75 = scmp.eq.s32.totalorder %s16, 1
    %p76 = por %p74, %p75
    %p77 = scmp.ne.s32.totalorder %s68, %s69
    %p78 = scmp.eq.s32.totalorder %s16, 0
    %p79 = por %p77, %p78
    %p80 = scmp.ne.s32.totalorder %s68, %s69
    %p81 = scmp.eq.s32.totalorder %s17, 1
    %p82 = por %p80, %p81
    %p84 = scmp.ne.s32.totalorder %s69, %s83
    %p85 = scmp.eq.s32.totalorder %s17, 0
    %p86 = por %p84, %p85
    %s88 = sadd.s32 %s87, 1
    %p91 = scmp.eq.s32.totalorder %s11, 1
    %p92 = scmp.ne.s32.totalorder %s87, %s89
    %p93 = scmp.eq.s32.totalorder %s11, 0
    %p94 = por %p92, %p93
    %p95 = scmp.ne.s32.totalorder %s87, %s89
    %p96 = scmp.eq.s32.totalorder %s16, 1
    %p97 = por %p95, %p96
    %p98 = scmp.ne.s32.totalorder %s89, %s90
    %p99 = scmp.eq.s32.totalorder %s16, 0
    %p100 = por %p98, %p99
    %p101 = scmp.ne.s32.totalorder %s89, %s90
    %p102 = scmp.eq.s32.totalorder %s17, 1
    %p103 = por %p101, %p102
    %p105 = scmp.ne.s32.totalorder %s90, %s104
    %p106 = scmp.eq.s32.totalorder %s17, 0
    %p107 = por %p105, %p106
    %s109 = sadd.s32 %s108, 1
    %p112 = scmp.eq.s32.totalorder %s11, 1
    %p113 = scmp.ne.s32.totalorder %s108, %s110
    %p114 = scmp.eq.s32.totalorder %s11, 0
    %p115 = por %p113, %p114
    %p116 = scmp.ne.s32.totalorder %s108, %s110
    %p117 = scmp.eq.s32.totalorder %s16, 1
    %p118 = por %p116, %p117
    %p119 = scmp.ne.s32.totalorder %s110, %s111
    %p120 = scmp.eq.s32.totalorder %s16, 0
    %p121 = por %p119, %p120
    %p122 = scmp.ne.s32.totalorder %s110, %s111
    %p123 = scmp.eq.s32.totalorder %s17, 1
    %p124 = por %p122, %p123
    %p126 = scmp.ne.s32.totalorder %s111, %s125
    %p127 = scmp.eq.s32.totalorder %s17, 0
    %p128 = por %p126, %p127
    %s129 = ssub.s32 %s11, %s18
    %p130 = scmp.eq.s32.totalorder %s129, 0
    %s132 = sadd.s32 %s131, 1
    %s133 = scalar_select %p130, %s131, %s132
    %p136 = pneg %p130
    %p137 = scmp.eq.s32.totalorder %s11, 1
    %p138 = por %p136, %p137
    %p139 = scmp.ne.s32.totalorder %s131, %s134
    %p140 = scmp.eq.s32.totalorder %s11, 0
    %p141 = por %p139, %p140
    %p142 = scmp.ne.s32.totalorder %s131, %s134
    %p143 = scmp.eq.s32.totalorder %s16, 1
    %p144 = por %p142, %p143
    %p145 = scmp.ne.s32.totalorder %s134, %s135
    %p146 = scmp.eq.s32.totalorder %s16, 0
    %p147 = por %p145, %p146
    %p148 = scmp.ne.s32.totalorder %s134, %s135
    %p149 = scmp.eq.s32.totalorder %s17, 1
    %p150 = por %p148, %p149
    %p152 = scmp.ne.s32.totalorder %s135, %s151
    %p153 = scmp.eq.s32.totalorder %s17, 0
    %p154 = por %p152, %p153
    %p155 = scmp.le.s32.totalorder 1, %s11
    %p156 = scmp.lt.s32.totalorder %s11, 3
    %p157 = pnand %p155, %p156
    %p158 = pneg %p157
    // Predicated region
    $region9: #{_lambda_.2} parent=5 // pred_check
      _
    $region10: #{_lambda_.2} parent=5 // pred_check_branch
      %160 = sbr.rel (%p157) target = $region12
    $region11: #{_lambda_.2} parent=5 // pred_region
      %s161 = ssub.s32 %s11, 1
      // Predicated region
      $region13: #{_lambda_.2} parent=11 // pred_check
        %p162 = pneg %p58
      $region14: #{_lambda_.2} parent=11 // pred_check_branch
        %164 = sbr.rel (%p162) target = $region16
      $region15: #{_lambda_.2} parent=11 // pred_region
        _
      $region16: #{_lambda_.2} parent=11 // pred_fallthru
        _
      // Predicated region
      $region17: #{_lambda_.2} parent=11 // pred_check
        %p165 = pneg %p79
      $region18: #{_lambda_.2} parent=11 // pred_check_branch
        %167 = sbr.rel (%p165) target = $region20
      $region19: #{_lambda_.2} parent=11 // pred_region
        _
      $region20: #{_lambda_.2} parent=11 // pred_fallthru
        _
      // Predicated region
      $region21: #{_lambda_.2} parent=11 // pred_check
        %p168 = pneg %p100
      $region22: #{_lambda_.2} parent=11 // pred_check_branch
        %170 = sbr.rel (%p168) target = $region24
      $region23: #{_lambda_.2} parent=11 // pred_region
        _
      $region24: #{_lambda_.2} parent=11 // pred_fallthru
        _
      // Predicated region
      $region25: #{_lambda_.2} parent=11 // pred_check
        %p171 = pneg %p121
      $region26: #{_lambda_.2} parent=11 // pred_check_branch
        %173 = sbr.rel (%p171) target = $region28
      $region27: #{_lambda_.2} parent=11 // pred_region
        _
      $region28: #{_lambda_.2} parent=11 // pred_fallthru
        _
    $region12: #{_lambda_.2} parent=5 // pred_fallthru
      _
    %p174 = scmp.lt.s32.totalorder %s11, 2
    // Predicated region
    $region29: #{_lambda_.2} parent=5 // pred_check
      %p175 = pneg %p174
    $region30: #{_lambda_.2} parent=5 // pred_check_branch
      %177 = sbr.rel (%p175) target = $region32
    $region31: #{_lambda_.2} parent=5 // pred_region
      // Predicated region
      $region33: #{_lambda_.2} parent=31 // pred_check
        %p178 = pneg %p31
      $region34: #{_lambda_.2} parent=31 // pred_check_branch
        %180 = sbr.rel (%p178) target = $region36
      $region35: #{_lambda_.2} parent=31 // pred_region
        %s181 = smul.u32 8, %s11
        %p182 = scmp.lt.s32.totalorder %s181, 15
        %s183 = scalar_select %p182, %s181, 15
        %s184 = smul.addr %s183, 4
        %s185 = scalar_lea.vmem %s0, %s184
        %s186 = smul.u32 8, %s11
      $region36: #{_lambda_.2} parent=31 // pred_fallthru
        _
    $region32: #{_lambda_.2} parent=5 // pred_fallthru
      _
    %p187 = scmp.le.s32.totalorder 1, %s11
    %p188 = scmp.lt.s32.totalorder %s11, 3
    %p189 = pnand %p187, %p188
    %p190 = pneg %p189
    // Predicated region
    $region37: #{_lambda_.2} parent=5 // pred_check
      _
    $region38: #{_lambda_.2} parent=5 // pred_check_branch
      %192 = sbr.rel (%p189) target = $region40
    $region39: #{_lambda_.2} parent=5 // pred_region
      %s193 = ssub.s32 %s11, 1
      %s194 = smul.u32 8, %s16
      %p195 = scmp.lt.s32.totalorder %s194, 15
      %s196 = scalar_select %p195, %s194, 15
      %s197 = smul.addr %s196, 4
      %s198 = scalar_lea.vmem %s0, %s197
      %p199 = pneg %p37
      %p200 = pneg %p34
      %p201 = pneg %p58
      %p202 = pneg %p55
      %p203 = pneg %p79
      %p204 = pneg %p76
      %p205 = pneg %p100
      %p206 = pneg %p97
      %p207 = pneg %p121
      %p208 = pneg %p118
      %p209 = pneg %p147
      %p210 = pneg %p144
      %p211 = scmp.lt.s32.totalorder %s16, 1
      %s212 = scalar_select %p211, %s16, 1
      %s213 = smul.addr %s212, 8
      %s214 = scalar_lea.vmem %s5, %s213
      %s215 = smul.u32 8, %s16
      %p216 = scmp.lt.s32.totalorder %s215, 15
      %s217 = scalar_select %p216, %s215, 15
      %s218 = smul.addr %s217, 4
      %s219 = scalar_lea.vmem %s0, %s218
      %s220 = smul.u32 8, %s16
      %p221 = scmp.lt.s32.totalorder %s16, 1
      %s222 = scalar_select %p221, %s16, 1
      %s223 = smul.addr %s222, 8
      %s224 = scalar_lea.vmem %s5, %s223
      %v226 = vld [vmem:[%s219] sm:$0xf]
      %v227 = vld [vmem:[%s219 + $0x4] sm:$0xf]
      %v228 = vld [vmem:[%s219 + $0x8] sm:$0xf]
      %v229 = vld [vmem:[%s219 + $0xc] sm:$0xf]
      %v230 = vld [vmem:[%s219 + $0x10] sm:$0xf]
      %v231 = vld [vmem:[%s219 + $0x14] sm:$0xf]
      %v232 = vld [vmem:[%s219 + $0x18] sm:$0xf]
      %v233 = vld [vmem:[%s219 + $0x1c] sm:$0xf]
      %v234 = vld [vmem:[%s1] sm:$0xf]
      %v235 = vld [vmem:[%s2] sm:$0x1]
      %v237 = vlaneseq
      %v238 = vshrl.u32 %v237, 7
      %v239 = vsub.s32 0, %v238
      %v240 = vrot.slane %v235, %v239
      %v250 = vunpack.c.l.b16 %v226
      %v251 = vunpack.c.l.b16 %v227
      %v252 = vunpack.c.l.b16 %v228
      %v253 = vunpack.c.l.b16 %v229
      %v254 = vunpack.c.l.b16 %v230
      %v255 = vunpack.c.l.b16 %v231
      %v256 = vunpack.c.l.b16 %v232
      %v257 = vunpack.c.l.b16 %v233
      %v258 = vpack.c.b16 %v251, %v250
      %v259 = vpack.c.b16 %v253, %v252
      %v260 = vpack.c.b16 %v255, %v254
      %v261 = vpack.c.b16 %v257, %v256
      %vm262 = vcmask 64512
      %v264 = vsel %vm262, %v258, 0
      %v267 = vsel %vm262, %v259, 0
      %v270 = vsel %vm262, %v260, 0
      %v273 = vsel %vm262, %v261, 0
      %vm275 = vcmask 1043456
      %v277 = vsel %vm275, %v234, 0
      %279 = vmatprep.subr.bf16.mxu0 0
      %280 = vmatpush1.bf16.msra.mxu0 %v277
      %281 = vmatprep.subr.bf16.mxu0 0
      %282 = vmatpush1.bf16.msra.mxu0 0
      %283 = vmatprep.subr.bf16.mxu0 0
      %284 = vmatpush1.bf16.msra.mxu0 0
      %285 = vmatprep.subr.bf16.mxu0 0
      %286 = vmatpush1.bf16.msra.mxu0 0
      %287 = vmatprep.subr.bf16.mxu0 0
      %288 = vmatpush1.bf16.msra.mxu0 0
      %289 = vmatprep.subr.bf16.mxu0 0
      %290 = vmatpush1.bf16.msra.mxu0 0
      %291 = vmatprep.subr.bf16.mxu0 0
      %292 = vmatpush1.bf16.msra.mxu0 0
      %293 = vmatprep.subr.bf16.mxu0 0
      %294 = vmatpush1.bf16.msra.mxu0 0
      %295 = vmatprep.subr.bf16.mxu0 0
      %296 = vmatpush1.bf16.msra.mxu0 0
      %297 = vmatprep.subr.bf16.mxu0 0
      %298 = vmatpush1.bf16.msra.mxu0 0
      %299 = vmatprep.subr.bf16.mxu0 0
      %300 = vmatpush1.bf16.msra.mxu0 0
      %301 = vmatprep.subr.bf16.mxu0 0
      %302 = vmatpush1.bf16.msra.mxu0 0
      %303 = vmatprep.subr.bf16.mxu0 0
      %304 = vmatpush1.bf16.msra.mxu0 0
      %305 = vmatprep.subr.bf16.mxu0 0
      %306 = vmatpush1.bf16.msra.mxu0 0
      %307 = vmatprep.subr.bf16.mxu0 0
      %308 = vmatpush1.bf16.msra.mxu0 0
      %309 = vmatprep.subr.bf16.mxu0 0
      %310 = vmatpush1.bf16.msra.mxu0 0
      %311 = vmatprep.mubr.bf16.mxu0 0
      %312 = vmatmul.mubr.bf16.gmra.mrb[0].mxu0 %v264
      %v313 = vpop.f32.mrb[0].mxu0
      %v314 = vadd.f32 %v240, %v313
      %v315 = vpop.f32.mrb[0].mxu0
      %v316 = vpop.f32.mrb[0].mxu0
      %v317 = vadd.f32 %v240, %v316
      %v318 = vpop.f32.mrb[0].mxu0
      %319 = vmatprep.mubr.bf16.mxu0 0
      %320 = vmatmul.mubr.bf16.gmra.mrb[0].mxu0 %v267
      %v321 = vpop.f32.mrb[0].mxu0
      %v322 = vadd.f32 %v240, %v321
      %v323 = vpop.f32.mrb[0].mxu0
      %v324 = vpop.f32.mrb[0].mxu0
      %v325 = vadd.f32 %v240, %v324
      %v326 = vpop.f32.mrb[0].mxu0
      %327 = vmatprep.mubr.bf16.mxu0 0
      %328 = vmatmul.mubr.bf16.gmra.mrb[0].mxu0 %v270
      %v329 = vpop.f32.mrb[0].mxu0
      %v330 = vadd.f32 %v240, %v329
      %v331 = vpop.f32.mrb[0].mxu0
      %v332 = vpop.f32.mrb[0].mxu0
      %v333 = vadd.f32 %v240, %v332
      %v334 = vpop.f32.mrb[0].mxu0
      %335 = vmatprep.mubr.bf16.mxu0 0
      %336 = vmatmul.mubr.bf16.gmra.mrb[0].mxu0 %v273
      %v337 = vpop.f32.mrb[0].mxu0
      %v338 = vadd.f32 %v240, %v337
      %v339 = vpop.f32.mrb[0].mxu0
      %v340 = vpop.f32.mrb[0].mxu0
      %v341 = vadd.f32 %v240, %v340
      %v342 = vpop.f32.mrb[0].mxu0
      %343 = vdwg.mxu0
      %v344 = vmax.f32 %v314, 0.0
      %v345 = vmax.f32 %v317, 0.0
      %v346 = vmax.f32 %v322, 0.0
      %v347 = vmax.f32 %v325, 0.0
      %v348 = vmax.f32 %v330, 0.0
      %v349 = vmax.f32 %v333, 0.0
      %v350 = vmax.f32 %v338, 0.0
      %v351 = vmax.f32 %v341, 0.0
      %v352 = vpack.c.bf16 %v345, %v344
      %v353 = vpack.c.bf16 %v347, %v346
      %v354 = vpack.c.bf16 %v349, %v348
      %v355 = vpack.c.bf16 %v351, %v350
      %v356 = vld [vmem:[%s3] sm:$0xf]
      %v357 = vld [vmem:[%s3 + $0x4] sm:$0xf]
      %v358 = vld [vmem:[%s3 + $0x8] sm:$0xf]
      %v359 = vld [vmem:[%s3 + $0xc] sm:$0xf]
      %v360 = vld [vmem:[%s3 + $0x10] sm:$0xf]
      %v361 = vld [vmem:[%s3 + $0x14] sm:$0xf]
      %v362 = vld [vmem:[%s3 + $0x18] sm:$0xf]
      %v363 = vld [vmem:[%s3 + $0x1c] sm:$0xf]
      %v364 = vld [vmem:[%s3 + $0x20] sm:$0xf]
      %v365 = vld [vmem:[%s3 + $0x24] sm:$0xf]
      %v366 = vld [vmem:[%s3 + $0x28] sm:$0xf]
      %v367 = vld [vmem:[%s3 + $0x2c] sm:$0xf]
      %v368 = vld [vmem:[%s3 + $0x30] sm:$0xf]
      %v369 = vld [vmem:[%s3 + $0x34] sm:$0xf]
      %v370 = vld [vmem:[%s3 + $0x38] sm:$0xf]
      %v371 = vld [vmem:[%s3 + $0x3c] sm:$0xf]
      %v372 = vld [vmem:[%s4] sm:$0x1]
      %v374 = vlaneseq
      %v375 = vshrl.u32 %v374, 7
      %v376 = vsub.s32 0, %v375
      %v377 = vrot.slane %v372, %v376
      %v395 = vunpack.c.l.b16 %v356
      %v396 = vunpack.c.l.b16 %v357
      %v397 = vunpack.c.l.b16 %v358
      %v398 = vunpack.c.l.b16 %v359
      %v399 = vunpack.c.l.b16 %v360
      %v400 = vunpack.c.l.b16 %v361
      %v401 = vunpack.c.l.b16 %v362
      %v402 = vunpack.c.l.b16 %v363
      %v403 = vunpack.c.l.b16 %v364
      %v404 = vunpack.c.l.b16 %v365
      %v405 = vunpack.c.l.b16 %v366
      %v406 = vunpack.c.l.b16 %v367
      %v407 = vunpack.c.l.b16 %v368
      %v408 = vunpack.c.l.b16 %v369
      %v409 = vunpack.c.l.b16 %v370
      %v410 = vunpack.c.l.b16 %v371
      %v411 = vpack.c.b16 %v396, %v395
      %v412 = vpack.c.b16 %v398, %v397
      %v413 = vpack.c.b16 %v400, %v399
      %v414 = vpack.c.b16 %v402, %v401
      %v415 = vpack.c.b16 %v404, %v403
      %v416 = vpack.c.b16 %v406, %v405
      %v417 = vpack.c.b16 %v408, %v407
      %v418 = vpack.c.b16 %v410, %v409
      %427 = vmatprep.subr.bf16.mxu0 0
      %428 = vmatpush1.bf16.msra.mxu0 %v411
      %429 = vmatprep.subr.bf16.mxu0 0
      %430 = vmatpush1.bf16.msra.mxu0 %v412
      %431 = vmatprep.subr.bf16.mxu0 0
      %432 = vmatpush1.bf16.msra.mxu0 %v413
      %433 = vmatprep.subr.bf16.mxu0 0
      %434 = vmatpush1.bf16.msra.mxu0 %v414
      %435 = vmatprep.subr.bf16.mxu0 0
      %436 = vmatpush1.bf16.msra.mxu0 %v415
      %437 = vmatprep.subr.bf16.mxu0 0
      %438 = vmatpush1.bf16.msra.mxu0 %v416
      %439 = vmatprep.subr.bf16.mxu0 0
      %440 = vmatpush1.bf16.msra.mxu0 %v417
      %441 = vmatprep.subr.bf16.mxu0 0
      %442 = vmatpush1.bf16.msra.mxu0 %v418
      %443 = vmatprep.subr.bf16.mxu0 0
      %444 = vmatpush1.bf16.msra.mxu0 0
      %445 = vmatprep.subr.bf16.mxu0 0
      %446 = vmatpush1.bf16.msra.mxu0 0
      %447 = vmatprep.subr.bf16.mxu0 0
      %448 = vmatpush1.bf16.msra.mxu0 0
      %449 = vmatprep.subr.bf16.mxu0 0
      %450 = vmatpush1.bf16.msra.mxu0 0
      %451 = vmatprep.subr.bf16.mxu0 0
      %452 = vmatpush1.bf16.msra.mxu0 0
      %453 = vmatprep.subr.bf16.mxu0 0
      %454 = vmatpush1.bf16.msra.mxu0 0
      %455 = vmatprep.subr.bf16.mxu0 0
      %456 = vmatpush1.bf16.msra.mxu0 0
      %457 = vmatprep.subr.bf16.mxu0 0
      %458 = vmatpush1.bf16.msra.mxu0 0
      %459 = vmatprep.mubr.bf16.mxu0 0
      %460 = vmatmul.mubr.bf16.gmra.mrb[0].mxu0 %v352
      %v461 = vpop.f32.mrb[0].mxu0
      %v462 = vadd.f32 %v377, %v461
      %v463 = vpop.f32.mrb[0].mxu0
      %v464 = vpop.f32.mrb[0].mxu0
      %v465 = vadd.f32 %v377, %v464
      %v466 = vpop.f32.mrb[0].mxu0
      %467 = vmatprep.mubr.bf16.mxu0 0
      %468 = vmatmul.mubr.bf16.gmra.mrb[0].mxu0 %v353
      %v469 = vpop.f32.mrb[0].mxu0
      %v470 = vadd.f32 %v377, %v469
      %v471 = vpop.f32.mrb[0].mxu0
      %v472 = vpop.f32.mrb[0].mxu0
      %v473 = vadd.f32 %v377, %v472
      %v474 = vpop.f32.mrb[0].mxu0
      %475 = vmatprep.mubr.bf16.mxu0 0
      %476 = vmatmul.mubr.bf16.gmra.mrb[0].mxu0 %v354
      %v477 = vpop.f32.mrb[0].mxu0
      %v478 = vadd.f32 %v377, %v477
      %v479 = vpop.f32.mrb[0].mxu0
      %v480 = vpop.f32.mrb[0].mxu0
      %v481 = vadd.f32 %v377, %v480
      %v482 = vpop.f32.mrb[0].mxu0
      %483 = vmatprep.mubr.bf16.mxu0 0
      %484 = vmatmul.mubr.bf16.gmra.mrb[0].mxu0 %v355
      %v485 = vpop.f32.mrb[0].mxu0
      %v486 = vadd.f32 %v377, %v485
      %v487 = vpop.f32.mrb[0].mxu0
      %v488 = vpop.f32.mrb[0].mxu0
      %v489 = vadd.f32 %v377, %v488
      %v490 = vpop.f32.mrb[0].mxu0
      %491 = vdwg.mxu0
      %v492 = vmax.f32 %v462, 0.0
      %v493 = vmax.f32 %v465, 0.0
      %v494 = vmax.f32 %v470, 0.0
      %v495 = vmax.f32 %v473, 0.0
      %v496 = vmax.f32 %v478, 0.0
      %v497 = vmax.f32 %v481, 0.0
      %v498 = vmax.f32 %v486, 0.0
      %v499 = vmax.f32 %v489, 0.0
      %v500 = vrot.slane %v492, 4
      %v501 = vmax.f32 %v492, %v500
      %v502 = vrot.slane %v501, 2
      %v503 = vmax.f32 %v501, %v502
      %v504 = vrot.slane %v503, 1
      %v505 = vmax.f32 %v503, %v504
      %v506 = vrot.slane %v493, 4
      %v507 = vmax.f32 %v493, %v506
      %v508 = vrot.slane %v507, 2
      %v509 = vmax.f32 %v507, %v508
      %v510 = vrot.slane %v509, 1
      %v511 = vmax.f32 %v509, %v510
      %v512 = vrot.slane %v494, 4
      %v513 = vmax.f32 %v494, %v512
      %v514 = vrot.slane %v513, 2
      %v515 = vmax.f32 %v513, %v514
      %v516 = vrot.slane %v515, 1
      %v517 = vmax.f32 %v515, %v516
      %v518 = vrot.slane %v495, 4
      %v519 = vmax.f32 %v495, %v518
      %v520 = vrot.slane %v519, 2
      %v521 = vmax.f32 %v519, %v520
      %v522 = vrot.slane %v521, 1
      %v523 = vmax.f32 %v521, %v522
      %v524 = vrot.slane %v496, 4
      %v525 = vmax.f32 %v496, %v524
      %v526 = vrot.slane %v525, 2
      %v527 = vmax.f32 %v525, %v526
      %v528 = vrot.slane %v527, 1
      %v529 = vmax.f32 %v527, %v528
      %v530 = vrot.slane %v497, 4
      %v531 = vmax.f32 %v497, %v530
      %v532 = vrot.slane %v531, 2
      %v533 = vmax.f32 %v531, %v532
      %v534 = vrot.slane %v533, 1
      %v535 = vmax.f32 %v533, %v534
      %v536 = vrot.slane %v498, 4
      %v537 = vmax.f32 %v498, %v536
      %v538 = vrot.slane %v537, 2
      %v539 = vmax.f32 %v537, %v538
      %v540 = vrot.slane %v539, 1
      %v541 = vmax.f32 %v539, %v540
      %v542 = vrot.slane %v499, 4
      %v543 = vmax.f32 %v499, %v542
      %v544 = vrot.slane %v543, 2
      %v545 = vmax.f32 %v543, %v544
      %v546 = vrot.slane %v545, 1
      %v547 = vmax.f32 %v545, %v546
      %vm556 = vcmask 1041409
      %v557 = vsel %vm556, %v511, %v505
      %vm558 = vcmask 1042434
      %v559 = vsel %vm558, %v517, %v557
      %vm560 = vcmask 1043459
      %v561 = vsel %vm560, %v523, %v559
      %vm562 = vcmask 1044484
      %v563 = vsel %vm562, %v529, %v561
      %vm564 = vcmask 1045509
      %v565 = vsel %vm564, %v535, %v563
      %vm566 = vcmask 1046534
      %v567 = vsel %vm566, %v541, %v565
      %vm568 = vcmask 1047559
      %v569 = vsel %vm568, %v547, %v567
      %571 = vst [vmem:[%s224] sm:$0xff] %v569
      %p572 = scmp.lt.s32.totalorder %s16, 1
      %s573 = scalar_select %p572, %s16, 1
      %s574 = smul.addr %s573, 8
      %s575 = scalar_lea.vmem %s5, %s574
      // Predicated region
      $region41: #{_lambda_.2} parent=39 // pred_check
        %p576 = pneg %p144
      $region42: #{_lambda_.2} parent=39 // pred_check_branch
        %578 = sbr.rel (%p576) target = $region44
      $region43: #{_lambda_.2} parent=39 // pred_region
        _
      $region44: #{_lambda_.2} parent=39 // pred_fallthru
        _
    $region40: #{_lambda_.2} parent=5 // pred_fallthru
      _
    %p579 = scmp.le.s32.totalorder 2, %s11
    // Predicated region
    $region45: #{_lambda_.2} parent=5 // pred_check
      %p580 = pneg %p579
    $region46: #{_lambda_.2} parent=5 // pred_check_branch
      %582 = sbr.rel (%p580) target = $region48
    $region47: #{_lambda_.2} parent=5 // pred_region
      %s583 = ssub.s32 %s11, 2
      // Predicated region
      $region49: #{_lambda_.2} parent=47 // pred_check
        %p584 = pneg %p150
      $region50: #{_lambda_.2} parent=47 // pred_check_branch
        %586 = sbr.rel (%p584) target = $region52
      $region51: #{_lambda_.2} parent=47 // pred_region
        %p587 = scmp.lt.s32.totalorder %s17, 1
        %s588 = scalar_select %p587, %s17, 1
        %s589 = smul.addr %s588, 8
        %s590 = scalar_lea.vmem %s5, %s589
      $region52: #{_lambda_.2} parent=47 // pred_fallthru
        _
    $region48: #{_lambda_.2} parent=5 // pred_fallthru
      _
  $region6: #{_lambda_.2} parent=0 // loop_footer
    %s15 = sadd.s32 1, %s11
  $region7: #{_lambda_.2} parent=0 // loop_footer_branch
    %10 = sbr.rel target = $region3
  $region8: #{_lambda_.2} parent=0 // loop_exit
    _

// kernel: _lambda_.3
$region0: #{_lambda_.3}
  #allocation0 [shape = 'u32[]', space=smem, size = 0x4, offset = 0x4, fixed_abs, tag = 'smem constant byte address 0x4 - core index']
  #allocation1 [shape = 'u32[144,128]{1,0:T(1,128)}', space=vmem, size = 0x12000, scoped, tag = 'internal scratch']
  %s0 = inlined_call_operand.vmem [shape: bf16[256,8], index: 0, kind: input, shape index: {}]
  %s1 = inlined_call_operand.vmem [shape: bf16[8,128], index: 1, kind: input, shape index: {}]
  %s2 = inlined_call_operand.vmem [shape: f32[1,128], index: 2, kind: input, shape index: {}]
  %s3 = inlined_call_operand.vmem [shape: bf16[128,128], index: 3, kind: input, shape index: {}]
  %s4 = inlined_call_operand.vmem [shape: f32[1,128], index: 4, kind: input, shape index: {}]
  %s5 = inlined_call_operand.vmem [shape: f32[16,128], index: 5, kind: output, shape index: {}]
  %s6 = sld [smem:[#allocation0]]
  $region53: #{_lambda_.3} parent=0
    _
  %s8 = ssub.s32 1, %s6
  %s9 = scalar_select 0, %s8, %s6
  loop: start=0, step=1, limit=4
  $region2: #{_lambda_.3} parent=0 // loop_pre_header
    _
  $region3: #{_lambda_.3} parent=0 // loop_header
    %s11 = sphi 0, %s15
    %p12 = scmp.ge.s32.totalorder %s11, 4
    %s21 = sphi 0, %s23
    %s24 = sphi 0, %s21
    %s25 = sphi 0, %s24
    %s41 = sphi 0, %s25
    %s45 = sphi 0, %s45
    %s47 = sphi 0, %s45
    %s48 = sphi 0, %s47
    %s62 = sphi 0, %s48
    %s66 = sphi 0, %s66
    %s68 = sphi 0, %s66
    %s69 = sphi 0, %s68
    %s83 = sphi 0, %s69
    %s87 = sphi 0, %s87
    %s89 = sphi 0, %s87
    %s90 = sphi 0, %s89
    %s104 = sphi 0, %s90
    %s108 = sphi 0, %s108
    %s110 = sphi 0, %s108
    %s111 = sphi 0, %s110
    %s125 = sphi 0, %s111
    %s131 = sphi 0, %s133
    %s134 = sphi 0, %s131
    %s135 = sphi 0, %s134
    %s151 = sphi 0, %s135
  $region4: #{_lambda_.3} parent=0 // loop_header_branch
    %14 = sbr.rel (%p12) target = $region8
  $region5: #{_lambda_.3} parent=0 // loop_body
    %s16 = ssub.s32 %s11, 1
    %s17 = ssub.s32 %s11, 2
    %s18 = sadd.s32 %s11, 1
    %s19 = ssub.s32 %s11, %s18
    %p20 = scmp.eq.s32.totalorder %s19, 0
    %s22 = sadd.s32 %s21, 1
    %s23 = scalar_select %p20, %s21, %s22
    %p26 = pneg %p20
    %p27 = scmp.eq.s32.totalorder %s11, 1
    %p28 = por %p26, %p27
    %p29 = scmp.ne.s32.totalorder %s21, %s24
    %p30 = scmp.eq.s32.totalorder %s11, 0
    %p31 = por %p29, %p30
    %p32 = scmp.ne.s32.totalorder %s21, %s24
    %p33 = scmp.eq.s32.totalorder %s16, 1
    %p34 = por %p32, %p33
    %p35 = scmp.ne.s32.totalorder %s24, %s25
    %p36 = scmp.eq.s32.totalorder %s16, 0
    %p37 = por %p35, %p36
    %p38 = scmp.ne.s32.totalorder %s24, %s25
    %p39 = scmp.eq.s32.totalorder %s17, 1
    %p40 = por %p38, %p39
    %p42 = scmp.ne.s32.totalorder %s25, %s41
    %p43 = scmp.eq.s32.totalorder %s17, 0
    %p44 = por %p42, %p43
    %s46 = sadd.s32 %s45, 1
    %p49 = scmp.eq.s32.totalorder %s11, 1
    %p50 = scmp.ne.s32.totalorder %s45, %s47
    %p51 = scmp.eq.s32.totalorder %s11, 0
    %p52 = por %p50, %p51
    %p53 = scmp.ne.s32.totalorder %s45, %s47
    %p54 = scmp.eq.s32.totalorder %s16, 1
    %p55 = por %p53, %p54
    %p56 = scmp.ne.s32.totalorder %s47, %s48
    %p57 = scmp.eq.s32.totalorder %s16, 0
    %p58 = por %p56, %p57
    %p59 = scmp.ne.s32.totalorder %s47, %s48
    %p60 = scmp.eq.s32.totalorder %s17, 1
    %p61 = por %p59, %p60
    %p63 = scmp.ne.s32.totalorder %s48, %s62
    %p64 = scmp.eq.s32.totalorder %s17, 0
    %p65 = por %p63, %p64
    %s67 = sadd.s32 %s66, 1
    %p70 = scmp.eq.s32.totalorder %s11, 1
    %p71 = scmp.ne.s32.totalorder %s66, %s68
    %p72 = scmp.eq.s32.totalorder %s11, 0
    %p73 = por %p71, %p72
    %p74 = scmp.ne.s32.totalorder %s66, %s68
    %p75 = scmp.eq.s32.totalorder %s16, 1
    %p76 = por %p74, %p75
    %p77 = scmp.ne.s32.totalorder %s68, %s69
    %p78 = scmp.eq.s32.totalorder %s16, 0
    %p79 = por %p77, %p78
    %p80 = scmp.ne.s32.totalorder %s68, %s69
    %p81 = scmp.eq.s32.totalorder %s17, 1
    %p82 = por %p80, %p81
    %p84 = scmp.ne.s32.totalorder %s69, %s83
    %p85 = scmp.eq.s32.totalorder %s17, 0
    %p86 = por %p84, %p85
    %s88 = sadd.s32 %s87, 1
    %p91 = scmp.eq.s32.totalorder %s11, 1
    %p92 = scmp.ne.s32.totalorder %s87, %s89
    %p93 = scmp.eq.s32.totalorder %s11, 0
    %p94 = por %p92, %p93
    %p95 = scmp.ne.s32.totalorder %s87, %s89
    %p96 = scmp.eq.s32.totalorder %s16, 1
    %p97 = por %p95, %p96
    %p98 = scmp.ne.s32.totalorder %s89, %s90
    %p99 = scmp.eq.s32.totalorder %s16, 0
    %p100 = por %p98, %p99
    %p101 = scmp.ne.s32.totalorder %s89, %s90
    %p102 = scmp.eq.s32.totalorder %s17, 1
    %p103 = por %p101, %p102
    %p105 = scmp.ne.s32.totalorder %s90, %s104
    %p106 = scmp.eq.s32.totalorder %s17, 0
    %p107 = por %p105, %p106
    %s109 = sadd.s32 %s108, 1
    %p112 = scmp.eq.s32.totalorder %s11, 1
    %p113 = scmp.ne.s32.totalorder %s108, %s110
    %p114 = scmp.eq.s32.totalorder %s11, 0
    %p115 = por %p113, %p114
    %p116 = scmp.ne.s32.totalorder %s108, %s110
    %p117 = scmp.eq.s32.totalorder %s16, 1
    %p118 = por %p116, %p117
    %p119 = scmp.ne.s32.totalorder %s110, %s111
    %p120 = scmp.eq.s32.totalorder %s16, 0
    %p121 = por %p119, %p120
    %p122 = scmp.ne.s32.totalorder %s110, %s111
    %p123 = scmp.eq.s32.totalorder %s17, 1
    %p124 = por %p122, %p123
    %p126 = scmp.ne.s32.totalorder %s111, %s125
    %p127 = scmp.eq.s32.totalorder %s17, 0
    %p128 = por %p126, %p127
    %s129 = ssub.s32 %s11, %s18
    %p130 = scmp.eq.s32.totalorder %s129, 0
    %s132 = sadd.s32 %s131, 1
    %s133 = scalar_select %p130, %s131, %s132
    %p136 = pneg %p130
    %p137 = scmp.eq.s32.totalorder %s11, 1
    %p138 = por %p136, %p137
    %p139 = scmp.ne.s32.totalorder %s131, %s134
    %p140 = scmp.eq.s32.totalorder %s11, 0
    %p141 = por %p139, %p140
    %p142 = scmp.ne.s32.totalorder %s131, %s134
    %p143 = scmp.eq.s32.totalorder %s16, 1
    %p144 = por %p142, %p143
    %p145 = scmp.ne.s32.totalorder %s134, %s135
    %p146 = scmp.eq.s32.totalorder %s16, 0
    %p147 = por %p145, %p146
    %p148 = scmp.ne.s32.totalorder %s134, %s135
    %p149 = scmp.eq.s32.totalorder %s17, 1
    %p150 = por %p148, %p149
    %p152 = scmp.ne.s32.totalorder %s135, %s151
    %p153 = scmp.eq.s32.totalorder %s17, 0
    %p154 = por %p152, %p153
    %p155 = scmp.le.s32.totalorder 1, %s11
    %p156 = scmp.lt.s32.totalorder %s11, 3
    %p157 = pnand %p155, %p156
    %p158 = pneg %p157
    // Predicated region
    $region9: #{_lambda_.3} parent=5 // pred_check
      _
    $region10: #{_lambda_.3} parent=5 // pred_check_branch
      %160 = sbr.rel (%p157) target = $region12
    $region11: #{_lambda_.3} parent=5 // pred_region
      %s161 = ssub.s32 %s11, 1
      // Predicated region
      $region13: #{_lambda_.3} parent=11 // pred_check
        %p162 = pneg %p58
      $region14: #{_lambda_.3} parent=11 // pred_check_branch
        %164 = sbr.rel (%p162) target = $region16
      $region15: #{_lambda_.3} parent=11 // pred_region
        _
      $region16: #{_lambda_.3} parent=11 // pred_fallthru
        _
      // Predicated region
      $region17: #{_lambda_.3} parent=11 // pred_check
        %p165 = pneg %p79
      $region18: #{_lambda_.3} parent=11 // pred_check_branch
        %167 = sbr.rel (%p165) target = $region20
      $region19: #{_lambda_.3} parent=11 // pred_region
        _
      $region20: #{_lambda_.3} parent=11 // pred_fallthru
        _
      // Predicated region
      $region21: #{_lambda_.3} parent=11 // pred_check
        %p168 = pneg %p100
      $region22: #{_lambda_.3} parent=11 // pred_check_branch
        %170 = sbr.rel (%p168) target = $region24
      $region23: #{_lambda_.3} parent=11 // pred_region
        _
      $region24: #{_lambda_.3} parent=11 // pred_fallthru
        _
      // Predicated region
      $region25: #{_lambda_.3} parent=11 // pred_check
        %p171 = pneg %p121
      $region26: #{_lambda_.3} parent=11 // pred_check_branch
        %173 = sbr.rel (%p171) target = $region28
      $region27: #{_lambda_.3} parent=11 // pred_region
        _
      $region28: #{_lambda_.3} parent=11 // pred_fallthru
        _
    $region12: #{_lambda_.3} parent=5 // pred_fallthru
      _
    %p174 = scmp.lt.s32.totalorder %s11, 2
    // Predicated region
    $region29: #{_lambda_.3} parent=5 // pred_check
      %p175 = pneg %p174
    $region30: #{_lambda_.3} parent=5 // pred_check_branch
      %177 = sbr.rel (%p175) target = $region32
    $region31: #{_lambda_.3} parent=5 // pred_region
      // Predicated region
      $region33: #{_lambda_.3} parent=31 // pred_check
        %p178 = pneg %p31
      $region34: #{_lambda_.3} parent=31 // pred_check_branch
        %180 = sbr.rel (%p178) target = $region36
      $region35: #{_lambda_.3} parent=31 // pred_region
        %s181 = smul.u32 16, %s11
        %p182 = scmp.lt.s32.totalorder %s181, 31
        %s183 = scalar_select %p182, %s181, 31
        %s184 = smul.addr %s183, 4
        %s185 = scalar_lea.vmem %s0, %s184
        %s186 = smul.u32 16, %s11
      $region36: #{_lambda_.3} parent=31 // pred_fallthru
        _
    $region32: #{_lambda_.3} parent=5 // pred_fallthru
      _
    %p187 = scmp.le.s32.totalorder 1, %s11
    %p188 = scmp.lt.s32.totalorder %s11, 3
    %p189 = pnand %p187, %p188
    %p190 = pneg %p189
    // Predicated region
    $region37: #{_lambda_.3} parent=5 // pred_check
      _
    $region38: #{_lambda_.3} parent=5 // pred_check_branch
      %192 = sbr.rel (%p189) target = $region40
    $region39: #{_lambda_.3} parent=5 // pred_region
      %s193 = ssub.s32 %s11, 1
      %s194 = smul.u32 16, %s16
      %p195 = scmp.lt.s32.totalorder %s194, 31
      %s196 = scalar_select %p195, %s194, 31
      %s197 = smul.addr %s196, 4
      %s198 = scalar_lea.vmem %s0, %s197
      %p199 = pneg %p37
      %p200 = pneg %p34
      %p201 = pneg %p58
      %p202 = pneg %p55
      %p203 = pneg %p79
      %p204 = pneg %p76
      %p205 = pneg %p100
      %p206 = pneg %p97
      %p207 = pneg %p121
      %p208 = pneg %p118
      %p209 = pneg %p147
      %p210 = pneg %p144
      %p211 = scmp.lt.s32.totalorder %s16, 1
      %s212 = scalar_select %p211, %s16, 1
      %s213 = smul.addr %s212, 8
      %s214 = scalar_lea.vmem %s5, %s213
      %s215 = smul.u32 16, %s16
      %p216 = scmp.lt.s32.totalorder %s215, 31
      %s217 = scalar_select %p216, %s215, 31
      %s218 = smul.addr %s217, 4
      %s219 = scalar_lea.vmem %s0, %s218
      %s220 = smul.u32 16, %s16
      %p221 = scmp.lt.s32.totalorder %s16, 1
      %s222 = scalar_select %p221, %s16, 1
      %s223 = smul.addr %s222, 8
      %s224 = scalar_lea.vmem %s5, %s223
      %v226 = vld [vmem:[%s219] sm:$0xf]
      %v227 = vld [vmem:[%s219 + $0x4] sm:$0xf]
      %v228 = vld [vmem:[%s219 + $0x8] sm:$0xf]
      %v229 = vld [vmem:[%s219 + $0xc] sm:$0xf]
      %v230 = vld [vmem:[%s219 + $0x10] sm:$0xf]
      %v231 = vld [vmem:[%s219 + $0x14] sm:$0xf]
      %v232 = vld [vmem:[%s219 + $0x18] sm:$0xf]
      %v233 = vld [vmem:[%s219 + $0x1c] sm:$0xf]
      %v234 = vld [vmem:[%s219 + $0x20] sm:$0xf]
      %v235 = vld [vmem:[%s219 + $0x24] sm:$0xf]
      %v236 = vld [vmem:[%s219 + $0x28] sm:$0xf]
      %v237 = vld [vmem:[%s219 + $0x2c] sm:$0xf]
      %v238 = vld [vmem:[%s219 + $0x30] sm:$0xf]
      %v239 = vld [vmem:[%s219 + $0x34] sm:$0xf]
      %v240 = vld [vmem:[%s219 + $0x38] sm:$0xf]
      %v241 = vld [vmem:[%s219 + $0x3c] sm:$0xf]
      %v242 = vld [vmem:[%s1] sm:$0xf]
      %v243 = vld [vmem:[%s2] sm:$0x1]
      %v245 = vlaneseq
      %v246 = vshrl.u32 %v245, 7
      %v247 = vsub.s32 0, %v246
      %v248 = vrot.slane %v243, %v247
      %v266 = vunpack.c.l.b16 %v226
      %v267 = vunpack.c.l.b16 %v227
      %v268 = vunpack.c.l.b16 %v228
      %v269 = vunpack.c.l.b16 %v229
      %v270 = vunpack.c.l.b16 %v230
      %v271 = vunpack.c.l.b16 %v231
      %v272 = vunpack.c.l.b16 %v232
      %v273 = vunpack.c.l.b16 %v233
      %v274 = vunpack.c.l.b16 %v234
      %v275 = vunpack.c.l.b16 %v235
      %v276 = vunpack.c.l.b16 %v236
      %v277 = vunpack.c.l.b16 %v237
      %v278 = vunpack.c.l.b16 %v238
      %v279 = vunpack.c.l.b16 %v239
      %v280 = vunpack.c.l.b16 %v240
      %v281 = vunpack.c.l.b16 %v241
      %v282 = vpack.c.b16 %v267, %v266
      %v283 = vpack.c.b16 %v269, %v268
      %v284 = vpack.c.b16 %v271, %v270
      %v285 = vpack.c.b16 %v273, %v272
      %v286 = vpack.c.b16 %v275, %v274
      %v287 = vpack.c.b16 %v277, %v276
      %v288 = vpack.c.b16 %v279, %v278
      %v289 = vpack.c.b16 %v281, %v280
      %vm290 = vcmask 64512
      %v292 = vsel %vm290, %v282, 0
      %v295 = vsel %vm290, %v283, 0
      %v298 = vsel %vm290, %v284, 0
      %v301 = vsel %vm290, %v285, 0
      %v304 = vsel %vm290, %v286, 0
      %v307 = vsel %vm290, %v287, 0
      %v310 = vsel %vm290, %v288, 0
      %v313 = vsel %vm290, %v289, 0
      %vm315 = vcmask 1043456
      %v317 = vsel %vm315, %v242, 0
      %319 = vmatprep.subr.bf16.mxu0 0
      %320 = vmatpush1.bf16.msra.mxu0 %v317
      %321 = vmatprep.subr.bf16.mxu0 0
      %322 = vmatpush1.bf16.msra.mxu0 0
      %323 = vmatprep.subr.bf16.mxu0 0
      %324 = vmatpush1.bf16.msra.mxu0 0
      %325 = vmatprep.subr.bf16.mxu0 0
      %326 = vmatpush1.bf16.msra.mxu0 0
      %327 = vmatprep.subr.bf16.mxu0 0
      %328 = vmatpush1.bf16.msra.mxu0 0
      %329 = vmatprep.subr.bf16.mxu0 0
      %330 = vmatpush1.bf16.msra.mxu0 0
      %331 = vmatprep.subr.bf16.mxu0 0
      %332 = vmatpush1.bf16.msra.mxu0 0
      %333 = vmatprep.subr.bf16.mxu0 0
      %334 = vmatpush1.bf16.msra.mxu0 0
      %335 = vmatprep.subr.bf16.mxu0 0
      %336 = vmatpush1.bf16.msra.mxu0 0
      %337 = vmatprep.subr.bf16.mxu0 0
      %338 = vmatpush1.bf16.msra.mxu0 0
      %339 = vmatprep.subr.bf16.mxu0 0
      %340 = vmatpush1.bf16.msra.mxu0 0
      %341 = vmatprep.subr.bf16.mxu0 0
      %342 = vmatpush1.bf16.msra.mxu0 0
      %343 = vmatprep.subr.bf16.mxu0 0
      %344 = vmatpush1.bf16.msra.mxu0 0
      %345 = vmatprep.subr.bf16.mxu0 0
      %346 = vmatpush1.bf16.msra.mxu0 0
      %347 = vmatprep.subr.bf16.mxu0 0
      %348 = vmatpush1.bf16.msra.mxu0 0
      %349 = vmatprep.subr.bf16.mxu0 0
      %350 = vmatpush1.bf16.msra.mxu0 0
      %351 = vmatprep.mubr.bf16.mxu0 0
      %352 = vmatmul.mubr.bf16.gmra.mrb[0].mxu0 %v292
      %v353 = vpop.f32.mrb[0].mxu0
      %v354 = vadd.f32 %v248, %v353
      %v355 = vpop.f32.mrb[0].mxu0
      %v356 = vpop.f32.mrb[0].mxu0
      %v357 = vadd.f32 %v248, %v356
      %v358 = vpop.f32.mrb[0].mxu0
      %359 = vmatprep.mubr.bf16.mxu0 0
      %360 = vmatmul.mubr.bf16.gmra.mrb[0].mxu0 %v295
      %v361 = vpop.f32.mrb[0].mxu0
      %v362 = vadd.f32 %v248, %v361
      %v363 = vpop.f32.mrb[0].mxu0
      %v364 = vpop.f32.mrb[0].mxu0
      %v365 = vadd.f32 %v248, %v364
      %v366 = vpop.f32.mrb[0].mxu0
      %367 = vmatprep.mubr.bf16.mxu0 0
      %368 = vmatmul.mubr.bf16.gmra.mrb[0].mxu0 %v298
      %v369 = vpop.f32.mrb[0].mxu0
      %v370 = vadd.f32 %v248, %v369
      %v371 = vpop.f32.mrb[0].mxu0
      %v372 = vpop.f32.mrb[0].mxu0
      %v373 = vadd.f32 %v248, %v372
      %v374 = vpop.f32.mrb[0].mxu0
      %375 = vmatprep.mubr.bf16.mxu0 0
      %376 = vmatmul.mubr.bf16.gmra.mrb[0].mxu0 %v301
      %v377 = vpop.f32.mrb[0].mxu0
      %v378 = vadd.f32 %v248, %v377
      %v379 = vpop.f32.mrb[0].mxu0
      %v380 = vpop.f32.mrb[0].mxu0
      %v381 = vadd.f32 %v248, %v380
      %v382 = vpop.f32.mrb[0].mxu0
      %383 = vmatprep.mubr.bf16.mxu0 0
      %384 = vmatmul.mubr.bf16.gmra.mrb[0].mxu0 %v304
      %v385 = vpop.f32.mrb[0].mxu0
      %v386 = vadd.f32 %v248, %v385
      %v387 = vpop.f32.mrb[0].mxu0
      %v388 = vpop.f32.mrb[0].mxu0
      %v389 = vadd.f32 %v248, %v388
      %v390 = vpop.f32.mrb[0].mxu0
      %391 = vmatprep.mubr.bf16.mxu0 0
      %392 = vmatmul.mubr.bf16.gmra.mrb[0].mxu0 %v307
      %v393 = vpop.f32.mrb[0].mxu0
      %v394 = vadd.f32 %v248, %v393
      %v395 = vpop.f32.mrb[0].mxu0
      %v396 = vpop.f32.mrb[0].mxu0
      %v397 = vadd.f32 %v248, %v396
      %v398 = vpop.f32.mrb[0].mxu0
      %399 = vmatprep.mubr.bf16.mxu0 0
      %400 = vmatmul.mubr.bf16.gmra.mrb[0].mxu0 %v310
      %v401 = vpop.f32.mrb[0].mxu0
      %v402 = vadd.f32 %v248, %v401
      %v403 = vpop.f32.mrb[0].mxu0
      %v404 = vpop.f32.mrb[0].mxu0
      %v405 = vadd.f32 %v248, %v404
      %v406 = vpop.f32.mrb[0].mxu0
      %407 = vmatprep.mubr.bf16.mxu0 0
      %408 = vmatmul.mubr.bf16.gmra.mrb[0].mxu0 %v313
      %v409 = vpop.f32.mrb[0].mxu0
      %v410 = vadd.f32 %v248, %v409
      %v411 = vpop.f32.mrb[0].mxu0
      %v412 = vpop.f32.mrb[0].mxu0
      %v413 = vadd.f32 %v248, %v412
      %v414 = vpop.f32.mrb[0].mxu0
      %415 = vdwg.mxu0
      %v416 = vmax.f32 %v354, 0.0
      %v417 = vmax.f32 %v357, 0.0
      %v418 = vmax.f32 %v362, 0.0
      %v419 = vmax.f32 %v365, 0.0
      %v420 = vmax.f32 %v370, 0.0
      %v421 = vmax.f32 %v373, 0.0
      %v422 = vmax.f32 %v378, 0.0
      %v423 = vmax.f32 %v381, 0.0
      %v424 = vmax.f32 %v386, 0.0
      %v425 = vmax.f32 %v389, 0.0
      %v426 = vmax.f32 %v394, 0.0
      %v427 = vmax.f32 %v397, 0.0
      %v428 = vmax.f32 %v402, 0.0
      %v429 = vmax.f32 %v405, 0.0
      %v430 = vmax.f32 %v410, 0.0
      %v431 = vmax.f32 %v413, 0.0
      %v432 = vpack.c.bf16 %v417, %v416
      %v433 = vpack.c.bf16 %v419, %v418
      %v434 = vpack.c.bf16 %v421, %v420
      %v435 = vpack.c.bf16 %v423, %v422
      %v436 = vpack.c.bf16 %v425, %v424
      %v437 = vpack.c.bf16 %v427, %v426
      %v438 = vpack.c.bf16 %v429, %v428
      %v439 = vpack.c.bf16 %v431, %v430
      %v440 = vld [vmem:[%s3] sm:$0xf]
      %v441 = vld [vmem:[%s3 + $0x4] sm:$0xf]
      %v442 = vld [vmem:[%s3 + $0x8] sm:$0xf]
      %v443 = vld [vmem:[%s3 + $0xc] sm:$0xf]
      %v444 = vld [vmem:[%s3 + $0x10] sm:$0xf]
      %v445 = vld [vmem:[%s3 + $0x14] sm:$0xf]
      %v446 = vld [vmem:[%s3 + $0x18] sm:$0xf]
      %v447 = vld [vmem:[%s3 + $0x1c] sm:$0xf]
      %v448 = vld [vmem:[%s3 + $0x20] sm:$0xf]
      %v449 = vld [vmem:[%s3 + $0x24] sm:$0xf]
      %v450 = vld [vmem:[%s3 + $0x28] sm:$0xf]
      %v451 = vld [vmem:[%s3 + $0x2c] sm:$0xf]
      %v452 = vld [vmem:[%s3 + $0x30] sm:$0xf]
      %v453 = vld [vmem:[%s3 + $0x34] sm:$0xf]
      %v454 = vld [vmem:[%s3 + $0x38] sm:$0xf]
      %v455 = vld [vmem:[%s3 + $0x3c] sm:$0xf]
      %v456 = vld [vmem:[%s4] sm:$0x1]
      %v458 = vlaneseq
      %v459 = vshrl.u32 %v458, 7
      %v460 = vsub.s32 0, %v459
      %v461 = vrot.slane %v456, %v460
      %v479 = vunpack.c.l.b16 %v440
      %v480 = vunpack.c.l.b16 %v441
      %v481 = vunpack.c.l.b16 %v442
      %v482 = vunpack.c.l.b16 %v443
      %v483 = vunpack.c.l.b16 %v444
      %v484 = vunpack.c.l.b16 %v445
      %v485 = vunpack.c.l.b16 %v446
      %v486 = vunpack.c.l.b16 %v447
      %v487 = vunpack.c.l.b16 %v448
      %v488 = vunpack.c.l.b16 %v449
      %v489 = vunpack.c.l.b16 %v450
      %v490 = vunpack.c.l.b16 %v451
      %v491 = vunpack.c.l.b16 %v452
      %v492 = vunpack.c.l.b16 %v453
      %v493 = vunpack.c.l.b16 %v454
      %v494 = vunpack.c.l.b16 %v455
      %v495 = vpack.c.b16 %v480, %v479
      %v496 = vpack.c.b16 %v482, %v481
      %v497 = vpack.c.b16 %v484, %v483
      %v498 = vpack.c.b16 %v486, %v485
      %v499 = vpack.c.b16 %v488, %v487
      %v500 = vpack.c.b16 %v490, %v489
      %v501 = vpack.c.b16 %v492, %v491
      %v502 = vpack.c.b16 %v494, %v493
      %511 = vmatprep.subr.bf16.mxu0 0
      %512 = vmatpush1.bf16.msra.mxu0 %v495
      %513 = vmatprep.subr.bf16.mxu0 0
      %514 = vmatpush1.bf16.msra.mxu0 %v496
      %515 = vmatprep.subr.bf16.mxu0 0
      %516 = vmatpush1.bf16.msra.mxu0 %v497
      %517 = vmatprep.subr.bf16.mxu0 0
      %518 = vmatpush1.bf16.msra.mxu0 %v498
      %519 = vmatprep.subr.bf16.mxu0 0
      %520 = vmatpush1.bf16.msra.mxu0 %v499
      %521 = vmatprep.subr.bf16.mxu0 0
      %522 = vmatpush1.bf16.msra.mxu0 %v500
      %523 = vmatprep.subr.bf16.mxu0 0
      %524 = vmatpush1.bf16.msra.mxu0 %v501
      %525 = vmatprep.subr.bf16.mxu0 0
      %526 = vmatpush1.bf16.msra.mxu0 %v502
      %527 = vmatprep.subr.bf16.mxu0 0
      %528 = vmatpush1.bf16.msra.mxu0 0
      %529 = vmatprep.subr.bf16.mxu0 0
      %530 = vmatpush1.bf16.msra.mxu0 0
      %531 = vmatprep.subr.bf16.mxu0 0
      %532 = vmatpush1.bf16.msra.mxu0 0
      %533 = vmatprep.subr.bf16.mxu0 0
      %534 = vmatpush1.bf16.msra.mxu0 0
      %535 = vmatprep.subr.bf16.mxu0 0
      %536 = vmatpush1.bf16.msra.mxu0 0
      %537 = vmatprep.subr.bf16.mxu0 0
      %538 = vmatpush1.bf16.msra.mxu0 0
      %539 = vmatprep.subr.bf16.mxu0 0
      %540 = vmatpush1.bf16.msra.mxu0 0
      %541 = vmatprep.subr.bf16.mxu0 0
      %542 = vmatpush1.bf16.msra.mxu0 0
      %543 = vmatprep.mubr.bf16.mxu0 0
      %544 = vmatmul.mubr.bf16.gmra.mrb[0].mxu0 %v432
      %v545 = vpop.f32.mrb[0].mxu0
      %v546 = vadd.f32 %v461, %v545
      %v547 = vpop.f32.mrb[0].mxu0
      %v548 = vpop.f32.mrb[0].mxu0
      %v549 = vadd.f32 %v461, %v548
      %v550 = vpop.f32.mrb[0].mxu0
      %551 = vmatprep.mubr.bf16.mxu0 0
      %552 = vmatmul.mubr.bf16.gmra.mrb[0].mxu0 %v433
      %v553 = vpop.f32.mrb[0].mxu0
      %v554 = vadd.f32 %v461, %v553
      %v555 = vpop.f32.mrb[0].mxu0
      %v556 = vpop.f32.mrb[0].mxu0
      %v557 = vadd.f32 %v461, %v556
      %v558 = vpop.f32.mrb[0].mxu0
      %559 = vmatprep.mubr.bf16.mxu0 0
      %560 = vmatmul.mubr.bf16.gmra.mrb[0].mxu0 %v434
      %v561 = vpop.f32.mrb[0].mxu0
      %v562 = vadd.f32 %v461, %v561
      %v563 = vpop.f32.mrb[0].mxu0
      %v564 = vpop.f32.mrb[0].mxu0
      %v565 = vadd.f32 %v461, %v564
      %v566 = vpop.f32.mrb[0].mxu0
      %567 = vmatprep.mubr.bf16.mxu0 0
      %568 = vmatmul.mubr.bf16.gmra.mrb[0].mxu0 %v435
      %v569 = vpop.f32.mrb[0].mxu0
      %v570 = vadd.f32 %v461, %v569
      %v571 = vpop.f32.mrb[0].mxu0
      %v572 = vpop.f32.mrb[0].mxu0
      %v573 = vadd.f32 %v461, %v572
      %v574 = vpop.f32.mrb[0].mxu0
      %575 = vmatprep.mubr.bf16.mxu0 0
      %576 = vmatmul.mubr.bf16.gmra.mrb[0].mxu0 %v436
      %v577 = vpop.f32.mrb[0].mxu0
      %v578 = vadd.f32 %v461, %v577
      %v579 = vpop.f32.mrb[0].mxu0
      %v580 = vpop.f32.mrb[0].mxu0
      %v581 = vadd.f32 %v461, %v580
      %v582 = vpop.f32.mrb[0].mxu0
      %583 = vmatprep.mubr.bf16.mxu0 0
      %584 = vmatmul.mubr.bf16.gmra.mrb[0].mxu0 %v437
      %v585 = vpop.f32.mrb[0].mxu0
      %v586 = vadd.f32 %v461, %v585
      %v587 = vpop.f32.mrb[0].mxu0
      %v588 = vpop.f32.mrb[0].mxu0
      %v589 = vadd.f32 %v461, %v588
      %v590 = vpop.f32.mrb[0].mxu0
      %591 = vmatprep.mubr.bf16.mxu0 0
      %592 = vmatmul.mubr.bf16.gmra.mrb[0].mxu0 %v438
      %v593 = vpop.f32.mrb[0].mxu0
      %v594 = vadd.f32 %v461, %v593
      %v595 = vpop.f32.mrb[0].mxu0
      %v596 = vpop.f32.mrb[0].mxu0
      %v597 = vadd.f32 %v461, %v596
      %v598 = vpop.f32.mrb[0].mxu0
      %599 = vmatprep.mubr.bf16.mxu0 0
      %600 = vmatmul.mubr.bf16.gmra.mrb[0].mxu0 %v439
      %v601 = vpop.f32.mrb[0].mxu0
      %v602 = vadd.f32 %v461, %v601
      %v603 = vpop.f32.mrb[0].mxu0
      %v604 = vpop.f32.mrb[0].mxu0
      %v605 = vadd.f32 %v461, %v604
      %v606 = vpop.f32.mrb[0].mxu0
      %607 = vdwg.mxu0
      %v608 = vmax.f32 %v546, 0.0
      %v609 = vmax.f32 %v549, 0.0
      %v610 = vmax.f32 %v554, 0.0
      %v611 = vmax.f32 %v557, 0.0
      %v612 = vmax.f32 %v562, 0.0
      %v613 = vmax.f32 %v565, 0.0
      %v614 = vmax.f32 %v570, 0.0
      %v615 = vmax.f32 %v573, 0.0
      %v616 = vmax.f32 %v578, 0.0
      %v617 = vmax.f32 %v581, 0.0
      %v618 = vmax.f32 %v586, 0.0
      %v619 = vmax.f32 %v589, 0.0
      %v620 = vmax.f32 %v594, 0.0
      %v621 = vmax.f32 %v597, 0.0
      %v622 = vmax.f32 %v602, 0.0
      %v623 = vmax.f32 %v605, 0.0
      %v624 = vmax.f32 %v608, %v609
      %v625 = vrot.slane %v624, 4
      %v626 = vmax.f32 %v624, %v625
      %v627 = vrot.slane %v626, 2
      %v628 = vmax.f32 %v626, %v627
      %v629 = vrot.slane %v628, 1
      %v630 = vmax.f32 %v628, %v629
      %v631 = vmax.f32 %v610, %v611
      %v632 = vrot.slane %v631, 4
      %v633 = vmax.f32 %v631, %v632
      %v634 = vrot.slane %v633, 2
      %v635 = vmax.f32 %v633, %v634
      %v636 = vrot.slane %v635, 1
      %v637 = vmax.f32 %v635, %v636
      %v638 = vmax.f32 %v612, %v613
      %v639 = vrot.slane %v638, 4
      %v640 = vmax.f32 %v638, %v639
      %v641 = vrot.slane %v640, 2
      %v642 = vmax.f32 %v640, %v641
      %v643 = vrot.slane %v642, 1
      %v644 = vmax.f32 %v642, %v643
      %v645 = vmax.f32 %v614, %v615
      %v646 = vrot.slane %v645, 4
      %v647 = vmax.f32 %v645, %v646
      %v648 = vrot.slane %v647, 2
      %v649 = vmax.f32 %v647, %v648
      %v650 = vrot.slane %v649, 1
      %v651 = vmax.f32 %v649, %v650
      %v652 = vmax.f32 %v616, %v617
      %v653 = vrot.slane %v652, 4
      %v654 = vmax.f32 %v652, %v653
      %v655 = vrot.slane %v654, 2
      %v656 = vmax.f32 %v654, %v655
      %v657 = vrot.slane %v656, 1
      %v658 = vmax.f32 %v656, %v657
      %v659 = vmax.f32 %v618, %v619
      %v660 = vrot.slane %v659, 4
      %v661 = vmax.f32 %v659, %v660
      %v662 = vrot.slane %v661, 2
      %v663 = vmax.f32 %v661, %v662
      %v664 = vrot.slane %v663, 1
      %v665 = vmax.f32 %v663, %v664
      %v666 = vmax.f32 %v620, %v621
      %v667 = vrot.slane %v666, 4
      %v668 = vmax.f32 %v666, %v667
      %v669 = vrot.slane %v668, 2
      %v670 = vmax.f32 %v668, %v669
      %v671 = vrot.slane %v670, 1
      %v672 = vmax.f32 %v670, %v671
      %v673 = vmax.f32 %v622, %v623
      %v674 = vrot.slane %v673, 4
      %v675 = vmax.f32 %v673, %v674
      %v676 = vrot.slane %v675, 2
      %v677 = vmax.f32 %v675, %v676
      %v678 = vrot.slane %v677, 1
      %v679 = vmax.f32 %v677, %v678
      %vm688 = vcmask 1041409
      %v689 = vsel %vm688, %v637, %v630
      %vm690 = vcmask 1042434
      %v691 = vsel %vm690, %v644, %v689
      %vm692 = vcmask 1043459
      %v693 = vsel %vm692, %v651, %v691
      %vm694 = vcmask 1044484
      %v695 = vsel %vm694, %v658, %v693
      %vm696 = vcmask 1045509
      %v697 = vsel %vm696, %v665, %v695
      %vm698 = vcmask 1046534
      %v699 = vsel %vm698, %v672, %v697
      %vm700 = vcmask 1047559
      %v701 = vsel %vm700, %v679, %v699
      %703 = vst [vmem:[%s224] sm:$0xff] %v701
      %p704 = scmp.lt.s32.totalorder %s16, 1
      %s705 = scalar_select %p704, %s16, 1
      %s706 = smul.addr %s705, 8
      %s707 = scalar_lea.vmem %s5, %s706
      // Predicated region
      $region41: #{_lambda_.3} parent=39 // pred_check
        %p708 = pneg %p144
      $region42: #{_lambda_.3} parent=39 // pred_check_branch
        %710 = sbr.rel (%p708) target = $region44
      $region43: #{_lambda_.3} parent=39 // pred_region
        _
      $region44: #{_lambda_.3} parent=39 // pred_fallthru
        _
    $region40: #{_lambda_.3} parent=5 // pred_fallthru
      _
    %p711 = scmp.le.s32.totalorder 2, %s11
    // Predicated region
    $region45: #{_lambda_.3} parent=5 // pred_check
      %p712 = pneg %p711
    $region46: #{_lambda_.3} parent=5 // pred_check_branch
      %714 = sbr.rel (%p712) target = $region48
    $region47: #{_lambda_.3} parent=5 // pred_region
      %s715 = ssub.s32 %s11, 2
      // Predicated region
      $region49: #{_lambda_.3} parent=47 // pred_check
        %p716 = pneg %p150
      $region50: #{_lambda_.3} parent=47 // pred_check_branch
        %718 = sbr.rel (%p716) target = $region52
      $region51: #{_lambda_.3} parent=47 // pred_region
        %p719 = scmp.lt.s32.totalorder %s17, 1
        %s720 = scalar_select %p719, %s17, 1
        %s721 = smul.addr %s720, 8
        %s722 = scalar_lea.vmem %s5, %s721
      $region52: #{_lambda_.3} parent=47 // pred_fallthru
        _
    $region48: #{_lambda_.3} parent=5 // pred_fallthru
      _
  $region6: #{_lambda_.3} parent=0 // loop_footer
    %s15 = sadd.s32 1, %s11
  $region7: #{_lambda_.3} parent=0 // loop_footer_branch
    %10 = sbr.rel target = $region3
  $region8: #{_lambda_.3} parent=0 // loop_exit
    _

</llo_original>
